<compile_context>
chip_gen: v7x
topology: tpu7x:2x2x1
jax: 0.10.0
libtpu: 0.0.40
codegen_flags: <defaults>
</compile_context>

<pallas_src>
import functools

import jax
import jax.numpy as jnp
from jax.experimental import pallas as pl
from jax.experimental.pallas import tpu as pltpu


_LANE = 128
_MXU_WIDTH = 256            # v6e/v7x MXU width: contractions narrower than this
                            # cost the same MXU cycles as a 256-wide one.
_RESIDENT_BYTES = 8 << 20   # keep H / X fully VMEM-resident below this size
_VMEM_CAP = 48 << 20        # scoped-VMEM ceiling (v7x has only 64 MiB physical)


def _round_up(n, m):
    return ((n + m - 1) // m) * m


def _pad2(x, rows, cols):
    return jnp.pad(x, ((0, rows - x.shape[0]), (0, cols - x.shape[1])))


def _vmem_limit(nbytes):
    """Scoped-VMEM request derived from the actual tile working set."""
    need = int(nbytes * 5 // 4) + (2 << 20)          # pipelining / layout headroom
    return int(max(32 << 20, min(_VMEM_CAP, need)))


def _choose_tiles(n):
    """Pick (n_pad, tm, tk): pad N modestly (<= ~12.5% extra rows), take the
    biggest row tile tm <= 2048 compatible with that padding, and the biggest
    reduction tile tk <= min(tm, 1024) that divides n_pad."""
    n128 = _round_up(n, _LANE)
    slack = max(n128 // 8, _LANE)
    tm, n_pad = _LANE, n128
    for t in (2048, 1024, 512, 256, 128):
        if t <= n128 and _round_up(n128, t) - n128 <= slack:
            tm, n_pad = t, _round_up(n128, t)
            break
    tk = next(t for t in (1024, 512, 256, 128) if t <= tm and n_pad % t == 0)
    # Note: on v7x megacore an even number of row tiles balances the two
    # TensorCores; we do not force extra padding for that here.
    return n_pad, tm, tk


# ---------------------------------------------------------------------------
# Kernels
# ---------------------------------------------------------------------------
def _feat_matmul_kernel(x_ref, w_ref, o_ref):
    # H = X @ W  (row tile of X, column tile of W; feature dims 128-padded).
    o_ref[...] = jnp.dot(x_ref[...], w_ref[...],
                         preferred_element_type=jnp.float32).astype(o_ref.dtype)


def _agg_bias_act_kernel(apply_relu, tk, h_resident, a_ref, h_ref, b_ref,
                         o_ref, acc_ref):
    # out = act(A @ H + b); reduction over A's column tiles (grid axis 1).
    k = pl.program_id(1)

    @pl.when(k == 0)
    def _():
        # Fold the bias into the accumulator init: epilogue = ReLU + cast only.
        acc_ref[...] = jnp.zeros_like(acc_ref) + b_ref[...]

    if h_resident:
        # H lives fully in VMEM (fetched once); slice the k-th tk-wide strip.
        off = pl.multiple_of(k * tk, tk)
        h_blk = h_ref[pl.ds(off, tk), :]
    else:
        h_blk = h_ref[...]
    acc_ref[...] += jnp.dot(a_ref[...], h_blk,
                            preferred_element_type=jnp.float32)

    @pl.when(k == pl.num_programs(1) - 1)
    def _():
        z = acc_ref[...]
        if apply_relu:
            z = jnp.maximum(z, 0.0)
        o_ref[...] = z.astype(o_ref.dtype)


def _agg_proj_bias_act_kernel(apply_relu, tk, x_resident, a_ref, x_ref, w_ref,
                              b_ref, o_ref, acc_ref):
    # out = act((A @ X) @ W + b): accumulate A@X over column tiles, project by
    # W (kept in f32 -> no bf16 double rounding) once in the epilogue.  Used
    # when the MXU-clamped input width is narrower than the output width.
    k = pl.program_id(1)

    @pl.when(k == 0)
    def _():
        acc_ref[...] = jnp.zeros_like(acc_ref)

    if x_resident:
        off = pl.multiple_of(k * tk, tk)
        x_blk = x_ref[pl.ds(off, tk), :]
    else:
        x_blk = x_ref[...]
    acc_ref[...] += jnp.dot(a_ref[...], x_blk,
                            preferred_element_type=jnp.float32)

    @pl.when(k == pl.num_programs(1) - 1)
    def _():
        z = jnp.dot(acc_ref[...], w_ref[...],
                    preferred_element_type=jnp.float32) + b_ref[...]
        if apply_relu:
            z = jnp.maximum(z, 0.0)
        o_ref[...] = z.astype(o_ref.dtype)


# ---------------------------------------------------------------------------
# pallas_call wrappers
# ---------------------------------------------------------------------------
def _feat_matmul(x, w, *, tm):
    n_pad, fin_p = x.shape
    fout_p = w.shape[1]
    tn = next(t for t in (512, 256, 128) if fout_p % t == 0)
    vlim = _vmem_limit(2 * tm * fin_p * 2 + 2 * fin_p * tn * 2 + 2 * tm * tn * 2)
    return pl.pallas_call(
        _feat_matmul_kernel,
        out_shape=jax.ShapeDtypeStruct((n_pad, fout_p), jnp.bfloat16),
        grid=(n_pad // tm, fout_p // tn),
        in_specs=[
            pl.BlockSpec((tm, fin_p), lambda i, j: (i, 0)),    # X row tile
            pl.BlockSpec((fin_p, tn), lambda i, j: (0, j)),    # W col tile
        ],
        out_specs=pl.BlockSpec((tm, tn), lambda i, j: (i, j)),
        compiler_params=pltpu.CompilerParams(
            dimension_semantics=("parallel", "parallel"),
            vmem_limit_bytes=vlim),
    )(x, w)


def _aggregate(a, h, b, *, apply_relu, out_dtype, tm, tk):
    n_pad = a.shape[0]
    fout_p = h.shape[1]
    h_resident = n_pad * fout_p * 2 <= _RESIDENT_BYTES
    if h_resident:
        h_spec = pl.BlockSpec((n_pad, fout_p), lambda i, k: (0, 0))
        h_bytes = 2 * n_pad * fout_p * 2
    else:
        h_spec = pl.BlockSpec((tk, fout_p), lambda i, k: (k, 0))
        h_bytes = 2 * tk * fout_p * 2
    out_sz = jnp.dtype(out_dtype).itemsize
    vlim = _vmem_limit(2 * tm * tk * 2 + h_bytes + 2 * tm * fout_p * out_sz
                       + tm * fout_p * 4 + 2 * fout_p * 4)
    kernel = functools.partial(_agg_bias_act_kernel, apply_relu, tk, h_resident)
    return pl.pallas_call(
        kernel,
        out_shape=jax.ShapeDtypeStruct((n_pad, fout_p), out_dtype),
        grid=(n_pad // tm, n_pad // tk),
        in_specs=[
            pl.BlockSpec((tm, tk), lambda i, k: (i, k)),        # A tile
            h_spec,                                             # H (resident or tile)
            pl.BlockSpec((1, fout_p), lambda i, k: (0, 0)),     # bias
        ],
        out_specs=pl.BlockSpec((tm, fout_p), lambda i, k: (i, 0)),
        scratch_shapes=[pltpu.VMEM((tm, fout_p), jnp.float32)],
        compiler_params=pltpu.CompilerParams(
            dimension_semantics=("parallel", "arbitrary"),
            vmem_limit_bytes=vlim),
    )(a, h, b)


def _aggregate_project(a, x, w, b, *, apply_relu, out_dtype, tm, tk):
    n_pad = a.shape[0]
    fin_p, fout_p = w.shape
    x_resident = n_pad * fin_p * 2 <= _RESIDENT_BYTES
    if x_resident:
        x_spec = pl.BlockSpec((n_pad, fin_p), lambda i, k: (0, 0))
        x_bytes = 2 * n_pad * fin_p * 2
    else:
        x_spec = pl.BlockSpec((tk, fin_p), lambda i, k: (k, 0))
        x_bytes = 2 * tk * fin_p * 2
    out_sz = jnp.dtype(out_dtype).itemsize
    vlim = _vmem_limit(2 * tm * tk * 2 + x_bytes + 2 * fin_p * fout_p * 4
                       + 2 * tm * fout_p * out_sz + tm * fin_p * 4
                       + 2 * fout_p * 4)
    kernel = functools.partial(_agg_proj_bias_act_kernel, apply_relu, tk,
                               x_resident)
    return pl.pallas_call(
        kernel,
        out_shape=jax.ShapeDtypeStruct((n_pad, fout_p), out_dtype),
        grid=(n_pad // tm, n_pad // tk),
        in_specs=[
            pl.BlockSpec((tm, tk), lambda i, k: (i, k)),        # A tile
            x_spec,                                             # X (resident or tile)
            pl.BlockSpec((fin_p, fout_p), lambda i, k: (0, 0)), # W (f32, resident)
            pl.BlockSpec((1, fout_p), lambda i, k: (0, 0)),     # bias
        ],
        out_specs=pl.BlockSpec((tm, fout_p), lambda i, k: (i, 0)),
        scratch_shapes=[pltpu.VMEM((tm, fin_p), jnp.float32)],
        compiler_params=pltpu.CompilerParams(
            dimension_semantics=("parallel", "arbitrary"),
            vmem_limit_bytes=vlim),
    )(a, x, w, b)


# ---------------------------------------------------------------------------
# Parameter prep (BN folding, padding, path choice) and forward pass
# ---------------------------------------------------------------------------
def prepare_params(params):
    """Fold inference BatchNorm1d into (W, b), pad features to 128 lanes,
    choose the per-layer matmul association and cast W accordingly."""
    nlayer = len(params["w"])
    prepared = []
    for i in range(nlayer):
        w = params["w"][i]
        b = params["b"][i]
        if i < nlayer - 1:                       # BN only on hidden layers
            s = params["gamma"][i] * jax.lax.rsqrt(params["var"][i] + 1e-5)
            w = w * s[None, :]
            b = (b - params["mean"][i]) * s + params["beta"][i]
        fin, fout = w.shape
        fin_p, fout_p = _round_up(fin, _LANE), _round_up(fout, _LANE)
        # MXU-width-aware association: only fuse (A@X)@W when the clamped
        # contraction width is genuinely narrower than the output width.
        fused = max(fin_p, _MXU_WIDTH) < max(fout_p, _MXU_WIDTH)
        w_p = _pad2(w, fin_p, fout_p)
        # Fused path: W stays f32 (epilogue projection of the f32 accumulator,
        # no bf16 double rounding).  Project-first path: W in bf16 for the MXU.
        w_p = w_p.astype(jnp.float32 if fused else jnp.bfloat16)
        b_p = jnp.pad(b, (0, fout_p - fout)).reshape(1, fout_p).astype(jnp.float32)
        prepared.append((fused, w_p, b_p))
    return prepared


def gnn_thr_forward(x, a_hat, params):
    """GNNThr.forward (eval mode): hidden layers conv -> BN -> ReLU ->
    dropout(p=0), then the final conv with no BN / activation."""
    nlayer = len(params["w"])
    n = x.shape[0]
    nclass = params["w"][-1].shape[1]

    n_pad, tm, tk = _choose_tiles(n)

    # Shrink the row tile if a very wide layer would blow the VMEM budget
    # (no-op for typical hidden widths).
    fmax = max(_round_up(max(w.shape), _LANE) for w in params["w"])

    def _agg_need(tm_, tk_):
        resident = n_pad * fmax * 2 <= _RESIDENT_BYTES
        h_b = 2 * n_pad * fmax * 2 if resident else 2 * tk_ * fmax * 2
        return 2 * tm_ * tk_ * 2 + h_b + 2 * tm_ * fmax * 4 + tm_ * fmax * 4

    while tm > 256 and _agg_need(tm, tk) > (40 << 20):
        tm //= 2
        tk = min(tk, tm)

    fin0_p = _round_up(x.shape[1], _LANE)
    a_bf = _pad2(a_hat, n_pad, n_pad).astype(jnp.bfloat16)
    h = _pad2(x, n_pad, fin0_p).astype(jnp.bfloat16)

    prepared = prepare_params(params)
    for i, (fused, w_p, b_p) in enumerate(prepared):
        last = i == nlayer - 1
        out_dtype = jnp.float32 if last else jnp.bfloat16
        if fused:
            # Narrow contraction first: (A @ X) @ W fused in one kernel.
            h = _aggregate_project(a_bf, h, w_p, b_p, apply_relu=not last,
                                   out_dtype=out_dtype, tm=tm, tk=tk)
        else:
            # Project first: H = X @ W (cheap), then tiled A @ H with epilogue.
            hw = _feat_matmul(h, w_p, tm=tm)
            h = _aggregate(a_bf, hw, b_p, apply_relu=not last,
                           out_dtype=out_dtype, tm=tm, tk=tk)
    return h[:n, :nclass]


# ---------------------------------------------------------------------------
# Glue: adjacency normalization, parameter init, references
# ---------------------------------------------------------------------------
def build_normalized_adjacency(edge_idx, n_nodes, rnorm=0.5, diag=1.0):
    """Dense A_hat = D^-rnorm (A + diag*I) D^-(1-rnorm).
    Note: duplicate edges accumulate weight > 1 (matches scatter-add message
    passing; confirm if the original Conv uses a binary adjacency)."""
    src, dst = edge_idx[0], edge_idx[1]
    a = jnp.zeros((n_nodes, n_nodes), jnp.float32)
    a = a.at[dst, src].add(1.0)              # aggregate src -> dst
    a = a + diag * jnp.eye(n_nodes, dtype=jnp.float32)
    deg = jnp.sum(a, axis=1)
    d_l = jnp.where(deg > 0, deg ** (-rnorm), 0.0)
    d_r = jnp.where(deg > 0, deg ** (-(1.0 - rnorm)), 0.0)
    return d_l[:, None] * a * d_r[None, :]


def init_params(key, nlayer, nfeat, nhidden, nclass):
    dims = [nfeat] + [nhidden] * (nlayer - 1) + [nclass]
    params = {"w": [], "b": [], "gamma": [], "beta": [], "mean": [], "var": []}
    for i in range(nlayer):
        fin, fout = dims[i], dims[i + 1]
        key, kw, km, kv = jax.random.split(key, 4)
        scale = (2.0 / (fin + fout)) ** 0.5          # glorot-ish
        params["w"].append(scale * jax.random.normal(kw, (fin, fout), jnp.float32))
        params["b"].append(jnp.zeros((fout,), jnp.float32))
        if i < nlayer - 1:                           # BN only on hidden layers
            params["gamma"].append(jnp.ones((fout,), jnp.float32))
            params["beta"].append(jnp.zeros((fout,), jnp.float32))
            params["mean"].append(0.1 * jax.random.normal(km, (fout,), jnp.float32))
            params["var"].append(1.0 + 0.1 * jax.random.uniform(kv, (fout,), jnp.float32))
    return params


def _reference_forward_f32(x, a_hat, params):
    """Original module semantics in pure f32 (unfolded BN)."""
    nlayer = len(params["w"])
    for i in range(nlayer - 1):
        z = a_hat @ (x @ params["w"][i]) + params["b"][i]
        z = ((z - params["mean"][i]) / jnp.sqrt(params["var"][i] + 1e-5)
             * params["gamma"][i] + params["beta"][i])
        x = jnp.maximum(z, 0.0)
    return a_hat @ (x @ params["w"][-1]) + params["b"][-1]


def _reference_forward_bf16(x, a_hat, params):
    """Mirrors the kernel's bf16 casts, BN folding and per-layer association."""
    nlayer = len(params["w"])
    a_bf = a_hat.astype(jnp.bfloat16)
    h = x.astype(jnp.bfloat16)
    for i in range(nlayer):
        last = i == nlayer - 1
        w = params["w"][i]
        b = params["b"][i]
        if not last:
            s = params["gamma"][i] * jax.lax.rsqrt(params["var"][i] + 1e-5)
            w = w * s[None, :]
            b = (b - params["mean"][i]) * s + params["beta"][i]
        fin_p = _round_up(w.shape[0], _LANE)
        fout_p = _round_up(w.shape[1], _LANE)
        if max(fin_p, _MXU_WIDTH) < max(fout_p, _MXU_WIDTH):
            ax = jnp.dot(a_bf, h, preferred_element_type=jnp.float32)
            z = jnp.dot(ax, w, preferred_element_type=jnp.float32) + b[None, :]
        else:
            hw = jnp.dot(h, w.astype(jnp.bfloat16),
                         preferred_element_type=jnp.float32).astype(jnp.bfloat16)
            z = jnp.dot(a_bf, hw, preferred_element_type=jnp.float32) + b[None, :]
        if last:
            return z
        h = jnp.maximum(z, 0.0).astype(jnp.bfloat16)


if __name__ == "__main__":
    key = jax.random.PRNGKey(0)

    # Two small configs consistent with the module:
    #  - N=200  (pads to one 256 tile): single-grid-step edge case.
    #  - N=700  (pads to 768, tm=tk=256): 3x3 aggregation grid exercising the
    #    multi-step f32 accumulator, resident-H slicing, and both association
    #    paths (fused (A@X)@W for 16->384, project-first for 384->384 / ->8).
    NLAYER, NFEAT, NHIDDEN, NCLASS = 3, 16, 384, 8
    for n_nodes, n_edges in ((200, 800), (700, 2800)):
        key, kx, ke, kp = jax.random.split(key, 4)
        x = jax.random.normal(kx, (n_nodes, NFEAT), jnp.float32)
        edge_idx = jax.random.randint(ke, (2, n_edges), 0, n_nodes, jnp.int32)

        a_hat = build_normalized_adjacency(edge_idx, n_nodes, rnorm=0.5, diag=1.0)
        params = init_params(kp, NLAYER, NFEAT, NHIDDEN, NCLASS)

        out = gnn_thr_forward(x, a_hat, params)
        out = jax.block_until_ready(out)
        assert out.shape == (n_nodes, NCLASS)

        # Exact-structure check (mirrors bf16 casts / folding / association).
        ref_bf = _reference_forward_bf16(x, a_hat, params)
        assert jnp.allclose(out, ref_bf, atol=2e-2, rtol=2e-2), "bf16-mirrored mismatch"

        # Semantics check against the original f32 module math (loose tolerance
        # only accounts for bf16 quantization of A / activations / weights).
        ref_f32 = _reference_forward_f32(x, a_hat, params)
        assert jnp.allclose(out, ref_f32, atol=8e-2, rtol=8e-2), "f32 semantics mismatch"

    print("KERNEL_OK")
</pallas_src>

<mosaic_0001>
module attributes {stable_mosaic.version = 11 : i64} {
  func.func @_agg_proj_bias_act_kernel(%arg0: i32, %arg1: i32, %arg2: memref<256x256xbf16, #tpu.memory_space<vmem>>, %arg3: memref<256x128xbf16, #tpu.memory_space<vmem>>, %arg4: memref<128x384xf32, #tpu.memory_space<vmem>>, %arg5: memref<1x384xf32, #tpu.memory_space<vmem>>, %arg6: memref<256x384xbf16, #tpu.memory_space<vmem>>, %arg7: memref<256x128xf32, #tpu.memory_space<vmem>>) attributes {dimension_semantics = [#tpu.dimension_semantics<parallel>, #tpu.dimension_semantics<arbitrary>], iteration_bounds = array<i64: 1, 1>, scalar_prefetch = 0 : i64, scratch_operands = 1 : i64, tpu.core_type = #tpu.core_type<tc>, window_params = [{transform_indices = @transform_0, window_bounds = array<i64: 256, 256>}, {pipeline_mode = #tpu.pipeline_mode<synchronous>, transform_indices = @transform_1, window_bounds = array<i64: 256, 128>}, {pipeline_mode = #tpu.pipeline_mode<synchronous>, transform_indices = @transform_2, window_bounds = array<i64: 128, 384>}, {pipeline_mode = #tpu.pipeline_mode<synchronous>, transform_indices = @transform_3, window_bounds = array<i64: 1, 384>}, {transform_indices = @transform_4, window_bounds = array<i64: 256, 384>}]} {
    %c0_i32 = arith.constant 0 : i32
    %0 = arith.cmpi eq, %arg1, %c0_i32 : i32
    %1 = arith.extui %0 : i1 to i32
    %c0_i32_0 = arith.constant 0 : i32
    %2 = arith.cmpi ne, %1, %c0_i32_0 : i32
    scf.if %2 {
      %cst_9 = arith.constant 0.000000e+00 : f32
      %15 = vector.broadcast %cst_9 : f32 to vector<256x128xf32>
      %c0_10 = arith.constant 0 : index
      %c0_11 = arith.constant 0 : index
      %16 = vector.load %arg7[%c0_10, %c0_11] : memref<256x128xf32, #tpu.memory_space<vmem>>, vector<256x128xf32>
      tpu.vector_store %arg7[%c0_10, %c0_11], %15 {strides = array<i32>} : memref<256x128xf32, #tpu.memory_space<vmem>>, vector<256x128xf32>,
    } else {
    }
    %c256_i32 = arith.constant 256 : i32
    %3 = arith.muli %arg1, %c256_i32 : i32
    %4 = tpu.assume_multiple %3, 256 : i32
    %5 = arith.index_cast %4 : i32 to index
    %c0 = arith.constant 0 : index
    %6 = vector.load %arg3[%5, %c0] : memref<256x128xbf16, #tpu.memory_space<vmem>>, vector<256x128xbf16>
    %c0_1 = arith.constant 0 : index
    %c0_2 = arith.constant 0 : index
    %7 = vector.load %arg7[%c0_1, %c0_2] : memref<256x128xf32, #tpu.memory_space<vmem>>, vector<256x128xf32>
    %c0_3 = arith.constant 0 : index
    %c0_4 = arith.constant 0 : index
    %8 = vector.load %arg2[%c0_3, %c0_4] : memref<256x256xbf16, #tpu.memory_space<vmem>>, vector<256x256xbf16>
    %cst = arith.constant dense<0.000000e+00> : vector<256x128xf32>
    %9 = tpu.matmul %8, %6, %cst {dimension_numbers = #tpu.dot_dimension_numbers<[1], [0], [0], [1], [0, 0, 1, 1], [], []>} : vector<256x256xbf16>, vector<256x128xbf16>, vector<256x128xf32> -> vector<256x128xf32>
    %10 = arith.addf %7, %9 : vector<256x128xf32>
    %c0_5 = arith.constant 0 : index
    %c0_6 = arith.constant 0 : index
    %11 = vector.load %arg7[%c0_5, %c0_6] : memref<256x128xf32, #tpu.memory_space<vmem>>, vector<256x128xf32>
    tpu.vector_store %arg7[%c0_5, %c0_6], %10 {strides = array<i32>} : memref<256x128xf32, #tpu.memory_space<vmem>>, vector<256x128xf32>,
    %c0_i32_7 = arith.constant 0 : i32
    %12 = arith.cmpi eq, %arg1, %c0_i32_7 : i32
    %13 = arith.extui %12 : i1 to i32
    %c0_i32_8 = arith.constant 0 : i32
    %14 = arith.cmpi ne, %13, %c0_i32_8 : i32
    scf.if %14 {
      %c0_9 = arith.constant 0 : index
      %c0_10 = arith.constant 0 : index
      %15 = vector.load %arg7[%c0_9, %c0_10] : memref<256x128xf32, #tpu.memory_space<vmem>>, vector<256x128xf32>
      %c0_11 = arith.constant 0 : index
      %c0_12 = arith.constant 0 : index
      %16 = vector.load %arg4[%c0_11, %c0_12] : memref<128x384xf32, #tpu.memory_space<vmem>>, vector<128x384xf32>
      %cst_13 = arith.constant dense<0.000000e+00> : vector<256x384xf32>
      %17 = tpu.matmul %15, %16, %cst_13 {dimension_numbers = #tpu.dot_dimension_numbers<[1], [0], [0], [1], [0, 0, 1, 1], [], []>} : vector<256x128xf32>, vector<128x384xf32>, vector<256x384xf32> -> vector<256x384xf32>
      %c0_14 = arith.constant 0 : index
      %c0_15 = arith.constant 0 : index
      %18 = vector.load %arg5[%c0_14, %c0_15] : memref<1x384xf32, #tpu.memory_space<vmem>>, vector<1x384xf32>
      %19 = vector.broadcast %18 : vector<1x384xf32> to vector<256x384xf32>
      %20 = arith.addf %17, %19 : vector<256x384xf32>
      %cst_16 = arith.constant 0.000000e+00 : f32
      %21 = vector.broadcast %cst_16 : f32 to vector<256x384xf32>
      %22 = arith.maximumf %20, %21 : vector<256x384xf32>
      %23 = arith.truncf %22 : vector<256x384xf32> to vector<256x384xbf16>
      %c0_17 = arith.constant 0 : index
      %c0_18 = arith.constant 0 : index
      %24 = vector.load %arg6[%c0_17, %c0_18] : memref<256x384xbf16, #tpu.memory_space<vmem>>, vector<256x384xbf16>
      tpu.vector_store %arg6[%c0_17, %c0_18], %23 {strides = array<i32>} : memref<256x384xbf16, #tpu.memory_space<vmem>>, vector<256x384xbf16>,
    } else {
    }
    return
  }
  func.func @transform_0(%arg0: i32, %arg1: i32) -> (i32, i32) {
    %c0_i32 = arith.constant 0 : i32
    return %arg0, %arg1 : i32, i32
  }
  func.func @transform_1(%arg0: i32, %arg1: i32) -> (i32, i32) {
    %c0_i32 = arith.constant 0 : i32
    %c0_i32_0 = arith.constant 0 : i32
    %c0_i32_1 = arith.constant 0 : i32
    return %c0_i32, %c0_i32_0 : i32, i32
  }
  func.func @transform_2(%arg0: i32, %arg1: i32) -> (i32, i32) {
    %c0_i32 = arith.constant 0 : i32
    %c0_i32_0 = arith.constant 0 : i32
    %c0_i32_1 = arith.constant 0 : i32
    return %c0_i32, %c0_i32_0 : i32, i32
  }
  func.func @transform_3(%arg0: i32, %arg1: i32) -> (i32, i32) {
    %c0_i32 = arith.constant 0 : i32
    %c0_i32_0 = arith.constant 0 : i32
    %c0_i32_1 = arith.constant 0 : i32
    return %c0_i32, %c0_i32_0 : i32, i32
  }
  func.func @transform_4(%arg0: i32, %arg1: i32) -> (i32, i32) {
    %c0_i32 = arith.constant 0 : i32
    %c0_i32_0 = arith.constant 0 : i32
    return %arg0, %c0_i32 : i32, i32
  }
}

</mosaic_0001>

<llo_original>
// kernel: tpu_custom_call.1
$region0: #{tpu_custom_call.1}
  #allocation0 [shape = 'u32[]', space=smem, size = 0x4, offset = 0x4, fixed_abs, tag = 'smem constant byte address 0x4 - core index']
  #allocation1 [shape = 'u32[144,128]{1,0:T(1,128)}', space=vmem, size = 0x12000, scoped, tag = 'internal scratch']
  #allocation2 [shape = 'f32[256,128]{1,0:T(8,128)}', space=vmem, size = 0x20000, scoped, tag = 'scratch operand']
  %s0 = inlined_call_operand.hbm [shape: bf16[256,256], index: 0, kind: input, shape index: {}]
  %s1 = inlined_call_operand.hbm [shape: bf16[256,128], index: 1, kind: input, shape index: {}]
  %s2 = inlined_call_operand.hbm [shape: f32[128,384], index: 2, kind: input, shape index: {}]
  %s3 = inlined_call_operand.vmem [shape: f32[1,384], index: 3, kind: input, shape index: {}]
  %s4 = inlined_call_operand.hbm [shape: bf16[256,384], index: 4, kind: output, shape index: {}]
  %s5 = sld [smem:[#allocation0]]
  $region46: #{tpu_custom_call.1} parent=0
    _
  %s7 = ssub.s32 1, %s5
  %s8 = scalar_select 0, %s7, %s5
  $region1: #{tpu_custom_call.1} parent=0
    #allocation3 [shape = 'u8[131072]{0}', space=vmem, size = 0x20000, scoped, tag = 'input window, operand 0, single buffered']
    #allocation4 [shape = 's32[1]{0}', space=sflag, size = 0x4, scoped, tag = 'scoped memory for tpu_custom_call.1']
    #allocation5 [shape = 's32[1]{0}', space=sflag, size = 0x4, scoped, tag = 'scoped memory for tpu_custom_call.1']
    #allocation6 [shape = 'u8[65536]{0}', space=vmem, size = 0x10000, scoped, tag = 'input window, operand 1, single buffered']
    #allocation7 [shape = 's32[1]{0}', space=sflag, size = 0x4, scoped, tag = 'scoped memory for tpu_custom_call.1']
    #allocation8 [shape = 'u8[196608]{0}', space=vmem, size = 0x30000, scoped, tag = 'input window, operand 2, single buffered']
    #allocation9 [shape = 'u8[196608]{0}', space=vmem, size = 0x30000, scoped, tag = 'output window, operand 0, single buffered']
    %9 = vsyncpa [#allocation4], 0
    %10 = vsyncpa [#allocation7], 0
    %11 = vsyncpa [#allocation5], 0
    // Predicated region
    $region2: #{tpu_custom_call.1} parent=1 // pred_check
      _
    $region3: #{tpu_custom_call.1} parent=1 // pred_check_branch
      %13 = sbr.rel (0) target = $region5
    $region4: #{tpu_custom_call.1} parent=1 // pred_region
      %s15 = ssub.s32 4096, 4096
      %16 = vsyncadd [#allocation4], %s15
      %s17 = sshll.u32 [#allocation3], 4
      %s18 = int_to_ptr.vmem [resolvable:$true] %s17
      %23 = dma.hbm_to_vmem [thread:$0]  %s0, 4096, %s18, [#allocation4], 128, 128, 8
    $region5: #{tpu_custom_call.1} parent=1 // pred_fallthru
      _
    // Predicated region
    $region6: #{tpu_custom_call.1} parent=1 // pred_check
      _
    $region7: #{tpu_custom_call.1} parent=1 // pred_check_branch
      %25 = sbr.rel (0) target = $region9
    $region8: #{tpu_custom_call.1} parent=1 // pred_region
      %s27 = ssub.s32 2048, 2048
      %28 = vsyncadd [#allocation7], %s27
      %s29 = sshll.u32 [#allocation6], 4
      %s30 = int_to_ptr.vmem [resolvable:$true] %s29
      %35 = dma.hbm_to_vmem [thread:$0]  %s1, 2048, %s30, [#allocation7], 64, 64, 4
    $region9: #{tpu_custom_call.1} parent=1 // pred_fallthru
      _
    // Predicated region
    $region10: #{tpu_custom_call.1} parent=1 // pred_check
      _
    $region11: #{tpu_custom_call.1} parent=1 // pred_check_branch
      %37 = sbr.rel (0) target = $region13
    $region12: #{tpu_custom_call.1} parent=1 // pred_region
      %s39 = ssub.s32 6144, 6144
      %40 = vsyncadd [#allocation7], %s39
      %s41 = sshll.u32 [#allocation8], 4
      %s42 = int_to_ptr.vmem [resolvable:$true] %s41
      %47 = dma.hbm_to_vmem [thread:$0]  %s2, 6144, %s42, [#allocation7], 384, 384, 24
    $region13: #{tpu_custom_call.1} parent=1 // pred_fallthru
      _
    // Predicated region
    $region14: #{tpu_custom_call.1} parent=1 // pred_check
      _
    $region15: #{tpu_custom_call.1} parent=1 // pred_check_branch
      %49 = sbr.rel (0) target = $region17
    $region16: #{tpu_custom_call.1} parent=1 // pred_region
      _
    $region17: #{tpu_custom_call.1} parent=1 // pred_fallthru
      _
    // Predicated region
    $region18: #{tpu_custom_call.1} parent=1 // pred_check
      _
    $region19: #{tpu_custom_call.1} parent=1 // pred_check_branch
      %51 = sbr.rel (0) target = $region21
    $region20: #{tpu_custom_call.1} parent=1 // pred_region
      %52 = dma.done [#allocation4], 4096
    $region21: #{tpu_custom_call.1} parent=1 // pred_fallthru
      _
    // Predicated region
    $region22: #{tpu_custom_call.1} parent=1 // pred_check
      _
    $region23: #{tpu_custom_call.1} parent=1 // pred_check_branch
      %54 = sbr.rel (0) target = $region25
    $region24: #{tpu_custom_call.1} parent=1 // pred_region
      %55 = dma.done [#allocation7], 2048
    $region25: #{tpu_custom_call.1} parent=1 // pred_fallthru
      _
    // Predicated region
    $region26: #{tpu_custom_call.1} parent=1 // pred_check
      _
    $region27: #{tpu_custom_call.1} parent=1 // pred_check_branch
      %57 = sbr.rel (0) target = $region29
    $region28: #{tpu_custom_call.1} parent=1 // pred_region
      %58 = dma.done [#allocation7], 6144
    $region29: #{tpu_custom_call.1} parent=1 // pred_fallthru
      _
    %p60 = scmp.eq.s32.totalorder 0, 0
    // Predicated region
    $region30: #{tpu_custom_call.1} parent=1 // pred_check
      %p61 = pneg %p60
    $region31: #{tpu_custom_call.1} parent=1 // pred_check_branch
      %63 = sbr.rel (%p61) target = $region33
    $region32: #{tpu_custom_call.1} parent=1 // pred_region
      %64 = vst [vmem:[#allocation2] sm:$0xff] 0.0
      %65 = vst [vmem:[#allocation2 + $0x8] sm:$0xff] 0.0
      %66 = vst [vmem:[#allocation2 + $0x10] sm:$0xff] 0.0
      %67 = vst [vmem:[#allocation2 + $0x18] sm:$0xff] 0.0
      %68 = vst [vmem:[#allocation2 + $0x20] sm:$0xff] 0.0
      %69 = vst [vmem:[#allocation2 + $0x28] sm:$0xff] 0.0
      %70 = vst [vmem:[#allocation2 + $0x30] sm:$0xff] 0.0
      %71 = vst [vmem:[#allocation2 + $0x38] sm:$0xff] 0.0
      %72 = vst [vmem:[#allocation2 + $0x40] sm:$0xff] 0.0
      %73 = vst [vmem:[#allocation2 + $0x48] sm:$0xff] 0.0
      %74 = vst [vmem:[#allocation2 + $0x50] sm:$0xff] 0.0
      %75 = vst [vmem:[#allocation2 + $0x58] sm:$0xff] 0.0
      %76 = vst [vmem:[#allocation2 + $0x60] sm:$0xff] 0.0
      %77 = vst [vmem:[#allocation2 + $0x68] sm:$0xff] 0.0
      %78 = vst [vmem:[#allocation2 + $0x70] sm:$0xff] 0.0
      %79 = vst [vmem:[#allocation2 + $0x78] sm:$0xff] 0.0
      %80 = vst [vmem:[#allocation2 + $0x80] sm:$0xff] 0.0
      %81 = vst [vmem:[#allocation2 + $0x88] sm:$0xff] 0.0
      %82 = vst [vmem:[#allocation2 + $0x90] sm:$0xff] 0.0
      %83 = vst [vmem:[#allocation2 + $0x98] sm:$0xff] 0.0
      %84 = vst [vmem:[#allocation2 + $0xa0] sm:$0xff] 0.0
      %85 = vst [vmem:[#allocation2 + $0xa8] sm:$0xff] 0.0
      %86 = vst [vmem:[#allocation2 + $0xb0] sm:$0xff] 0.0
      %87 = vst [vmem:[#allocation2 + $0xb8] sm:$0xff] 0.0
      %88 = vst [vmem:[#allocation2 + $0xc0] sm:$0xff] 0.0
      %89 = vst [vmem:[#allocation2 + $0xc8] sm:$0xff] 0.0
      %90 = vst [vmem:[#allocation2 + $0xd0] sm:$0xff] 0.0
      %91 = vst [vmem:[#allocation2 + $0xd8] sm:$0xff] 0.0
      %92 = vst [vmem:[#allocation2 + $0xe0] sm:$0xff] 0.0
      %93 = vst [vmem:[#allocation2 + $0xe8] sm:$0xff] 0.0
      %94 = vst [vmem:[#allocation2 + $0xf0] sm:$0xff] 0.0
      %95 = vst [vmem:[#allocation2 + $0xf8] sm:$0xff] 0.0
    $region33: #{tpu_custom_call.1} parent=1 // pred_fallthru
      _
    %s96 = smul.u32 0, 256
    %s97 = sshra.s32 %s96, 3
    %s98 = sand.u32 %s96, 7
    %s99 = smul.addr %s97, 4
    %s100 = scalar_lea.vmem [#allocation6], %s99
    %v101 = vld [vmem:[%s100] sm:$0xf]
    %v102 = vld [vmem:[%s100 + $0x4] sm:$0xf]
    %v103 = vld [vmem:[%s100 + $0x8] sm:$0xf]
    %v104 = vld [vmem:[%s100 + $0xc] sm:$0xf]
    %v105 = vld [vmem:[%s100 + $0x10] sm:$0xf]
    %v106 = vld [vmem:[%s100 + $0x14] sm:$0xf]
    %v107 = vld [vmem:[%s100 + $0x18] sm:$0xf]
    %v108 = vld [vmem:[%s100 + $0x1c] sm:$0xf]
    %v109 = vld [vmem:[%s100 + $0x20] sm:$0xf]
    %v110 = vld [vmem:[%s100 + $0x24] sm:$0xf]
    %v111 = vld [vmem:[%s100 + $0x28] sm:$0xf]
    %v112 = vld [vmem:[%s100 + $0x2c] sm:$0xf]
    %v113 = vld [vmem:[%s100 + $0x30] sm:$0xf]
    %v114 = vld [vmem:[%s100 + $0x34] sm:$0xf]
    %v115 = vld [vmem:[%s100 + $0x38] sm:$0xf]
    %v116 = vld [vmem:[%s100 + $0x3c] sm:$0xf]
    %v117 = vld [vmem:[%s100 + $0x40] sm:$0xf]
    %v118 = vld [vmem:[%s100 + $0x44] sm:$0xf]
    %v119 = vld [vmem:[%s100 + $0x48] sm:$0xf]
    %v120 = vld [vmem:[%s100 + $0x4c] sm:$0xf]
    %v121 = vld [vmem:[%s100 + $0x50] sm:$0xf]
    %v122 = vld [vmem:[%s100 + $0x54] sm:$0xf]
    %v123 = vld [vmem:[%s100 + $0x58] sm:$0xf]
    %v124 = vld [vmem:[%s100 + $0x5c] sm:$0xf]
    %v125 = vld [vmem:[%s100 + $0x60] sm:$0xf]
    %v126 = vld [vmem:[%s100 + $0x64] sm:$0xf]
    %v127 = vld [vmem:[%s100 + $0x68] sm:$0xf]
    %v128 = vld [vmem:[%s100 + $0x6c] sm:$0xf]
    %v129 = vld [vmem:[%s100 + $0x70] sm:$0xf]
    %v130 = vld [vmem:[%s100 + $0x74] sm:$0xf]
    %v131 = vld [vmem:[%s100 + $0x78] sm:$0xf]
    %v132 = vld [vmem:[%s100 + $0x7c] sm:$0xf]
    %v133 = vld [vmem:[#allocation2] sm:$0xff]
    %v134 = vld [vmem:[#allocation2 + $0x8] sm:$0xff]
    %v135 = vld [vmem:[#allocation2 + $0x10] sm:$0xff]
    %v136 = vld [vmem:[#allocation2 + $0x18] sm:$0xff]
    %v137 = vld [vmem:[#allocation2 + $0x20] sm:$0xff]
    %v138 = vld [vmem:[#allocation2 + $0x28] sm:$0xff]
    %v139 = vld [vmem:[#allocation2 + $0x30] sm:$0xff]
    %v140 = vld [vmem:[#allocation2 + $0x38] sm:$0xff]
    %v141 = vld [vmem:[#allocation2 + $0x40] sm:$0xff]
    %v142 = vld [vmem:[#allocation2 + $0x48] sm:$0xff]
    %v143 = vld [vmem:[#allocation2 + $0x50] sm:$0xff]
    %v144 = vld [vmem:[#allocation2 + $0x58] sm:$0xff]
    %v145 = vld [vmem:[#allocation2 + $0x60] sm:$0xff]
    %v146 = vld [vmem:[#allocation2 + $0x68] sm:$0xff]
    %v147 = vld [vmem:[#allocation2 + $0x70] sm:$0xff]
    %v148 = vld [vmem:[#allocation2 + $0x78] sm:$0xff]
    %v149 = vld [vmem:[#allocation2 + $0x80] sm:$0xff]
    %v150 = vld [vmem:[#allocation2 + $0x88] sm:$0xff]
    %v151 = vld [vmem:[#allocation2 + $0x90] sm:$0xff]
    %v152 = vld [vmem:[#allocation2 + $0x98] sm:$0xff]
    %v153 = vld [vmem:[#allocation2 + $0xa0] sm:$0xff]
    %v154 = vld [vmem:[#allocation2 + $0xa8] sm:$0xff]
    %v155 = vld [vmem:[#allocation2 + $0xb0] sm:$0xff]
    %v156 = vld [vmem:[#allocation2 + $0xb8] sm:$0xff]
    %v157 = vld [vmem:[#allocation2 + $0xc0] sm:$0xff]
    %v158 = vld [vmem:[#allocation2 + $0xc8] sm:$0xff]
    %v159 = vld [vmem:[#allocation2 + $0xd0] sm:$0xff]
    %v160 = vld [vmem:[#allocation2 + $0xd8] sm:$0xff]
    %v161 = vld [vmem:[#allocation2 + $0xe0] sm:$0xff]
    %v162 = vld [vmem:[#allocation2 + $0xe8] sm:$0xff]
    %v163 = vld [vmem:[#allocation2 + $0xf0] sm:$0xff]
    %v164 = vld [vmem:[#allocation2 + $0xf8] sm:$0xff]
    %v165 = vld [vmem:[#allocation3] sm:$0xff]
    %v166 = vld [vmem:[#allocation3 + $0x8] sm:$0xff]
    %v167 = vld [vmem:[#allocation3 + $0x10] sm:$0xff]
    %v168 = vld [vmem:[#allocation3 + $0x18] sm:$0xff]
    %v169 = vld [vmem:[#allocation3 + $0x20] sm:$0xff]
    %v170 = vld [vmem:[#allocation3 + $0x28] sm:$0xff]
    %v171 = vld [vmem:[#allocation3 + $0x30] sm:$0xff]
    %v172 = vld [vmem:[#allocation3 + $0x38] sm:$0xff]
    %v173 = vld [vmem:[#allocation3 + $0x40] sm:$0xff]
    %v174 = vld [vmem:[#allocation3 + $0x48] sm:$0xff]
    %v175 = vld [vmem:[#allocation3 + $0x50] sm:$0xff]
    %v176 = vld [vmem:[#allocation3 + $0x58] sm:$0xff]
    %v177 = vld [vmem:[#allocation3 + $0x60] sm:$0xff]
    %v178 = vld [vmem:[#allocation3 + $0x68] sm:$0xff]
    %v179 = vld [vmem:[#allocation3 + $0x70] sm:$0xff]
    %v180 = vld [vmem:[#allocation3 + $0x78] sm:$0xff]
    %v181 = vld [vmem:[#allocation3 + $0x80] sm:$0xff]
    %v182 = vld [vmem:[#allocation3 + $0x88] sm:$0xff]
    %v183 = vld [vmem:[#allocation3 + $0x90] sm:$0xff]
    %v184 = vld [vmem:[#allocation3 + $0x98] sm:$0xff]
    %v185 = vld [vmem:[#allocation3 + $0xa0] sm:$0xff]
    %v186 = vld [vmem:[#allocation3 + $0xa8] sm:$0xff]
    %v187 = vld [vmem:[#allocation3 + $0xb0] sm:$0xff]
    %v188 = vld [vmem:[#allocation3 + $0xb8] sm:$0xff]
    %v189 = vld [vmem:[#allocation3 + $0xc0] sm:$0xff]
    %v190 = vld [vmem:[#allocation3 + $0xc8] sm:$0xff]
    %v191 = vld [vmem:[#allocation3 + $0xd0] sm:$0xff]
    %v192 = vld [vmem:[#allocation3 + $0xd8] sm:$0xff]
    %v193 = vld [vmem:[#allocation3 + $0xe0] sm:$0xff]
    %v194 = vld [vmem:[#allocation3 + $0xe8] sm:$0xff]
    %v195 = vld [vmem:[#allocation3 + $0xf0] sm:$0xff]
    %v196 = vld [vmem:[#allocation3 + $0xf8] sm:$0xff]
    %v229 = vunpack.c.l.b16 %v165
    %v230 = vunpack.c.h.b16 %v165
    %v231 = vunpack.c.l.b16 %v166
    %v232 = vunpack.c.h.b16 %v166
    %v233 = vunpack.c.l.b16 %v167
    %v234 = vunpack.c.h.b16 %v167
    %v235 = vunpack.c.l.b16 %v168
    %v236 = vunpack.c.h.b16 %v168
    %v237 = vunpack.c.l.b16 %v169
    %v238 = vunpack.c.h.b16 %v169
    %v239 = vunpack.c.l.b16 %v170
    %v240 = vunpack.c.h.b16 %v170
    %v241 = vunpack.c.l.b16 %v171
    %v242 = vunpack.c.h.b16 %v171
    %v243 = vunpack.c.l.b16 %v172
    %v244 = vunpack.c.h.b16 %v172
    %v245 = vunpack.c.l.b16 %v173
    %v246 = vunpack.c.h.b16 %v173
    %v247 = vunpack.c.l.b16 %v174
    %v248 = vunpack.c.h.b16 %v174
    %v249 = vunpack.c.l.b16 %v175
    %v250 = vunpack.c.h.b16 %v175
    %v251 = vunpack.c.l.b16 %v176
    %v252 = vunpack.c.h.b16 %v176
    %v253 = vunpack.c.l.b16 %v177
    %v254 = vunpack.c.h.b16 %v177
    %v255 = vunpack.c.l.b16 %v178
    %v256 = vunpack.c.h.b16 %v178
    %v257 = vunpack.c.l.b16 %v179
    %v258 = vunpack.c.h.b16 %v179
    %v259 = vunpack.c.l.b16 %v180
    %v260 = vunpack.c.h.b16 %v180
    %v261 = vunpack.c.l.b16 %v181
    %v262 = vunpack.c.h.b16 %v181
    %v263 = vunpack.c.l.b16 %v182
    %v264 = vunpack.c.h.b16 %v182
    %v265 = vunpack.c.l.b16 %v183
    %v266 = vunpack.c.h.b16 %v183
    %v267 = vunpack.c.l.b16 %v184
    %v268 = vunpack.c.h.b16 %v184
    %v269 = vunpack.c.l.b16 %v185
    %v270 = vunpack.c.h.b16 %v185
    %v271 = vunpack.c.l.b16 %v186
    %v272 = vunpack.c.h.b16 %v186
    %v273 = vunpack.c.l.b16 %v187
    %v274 = vunpack.c.h.b16 %v187
    %v275 = vunpack.c.l.b16 %v188
    %v276 = vunpack.c.h.b16 %v188
    %v277 = vunpack.c.l.b16 %v189
    %v278 = vunpack.c.h.b16 %v189
    %v279 = vunpack.c.l.b16 %v190
    %v280 = vunpack.c.h.b16 %v190
    %v281 = vunpack.c.l.b16 %v191
    %v282 = vunpack.c.h.b16 %v191
    %v283 = vunpack.c.l.b16 %v192
    %v284 = vunpack.c.h.b16 %v192
    %v285 = vunpack.c.l.b16 %v193
    %v286 = vunpack.c.h.b16 %v193
    %v287 = vunpack.c.l.b16 %v194
    %v288 = vunpack.c.h.b16 %v194
    %v289 = vunpack.c.l.b16 %v195
    %v290 = vunpack.c.h.b16 %v195
    %v291 = vunpack.c.l.b16 %v196
    %v292 = vunpack.c.h.b16 %v196
    %v293 = vpack.c.b16 %v231, %v229
    %v294 = vpack.c.b16 %v232, %v230
    %v295 = vpack.c.b16 %v235, %v233
    %v296 = vpack.c.b16 %v236, %v234
    %v297 = vpack.c.b16 %v239, %v237
    %v298 = vpack.c.b16 %v240, %v238
    %v299 = vpack.c.b16 %v243, %v241
    %v300 = vpack.c.b16 %v244, %v242
    %v301 = vpack.c.b16 %v247, %v245
    %v302 = vpack.c.b16 %v248, %v246
    %v303 = vpack.c.b16 %v251, %v249
    %v304 = vpack.c.b16 %v252, %v250
    %v305 = vpack.c.b16 %v255, %v253
    %v306 = vpack.c.b16 %v256, %v254
    %v307 = vpack.c.b16 %v259, %v257
    %v308 = vpack.c.b16 %v260, %v258
    %v309 = vpack.c.b16 %v263, %v261
    %v310 = vpack.c.b16 %v264, %v262
    %v311 = vpack.c.b16 %v267, %v265
    %v312 = vpack.c.b16 %v268, %v266
    %v313 = vpack.c.b16 %v271, %v269
    %v314 = vpack.c.b16 %v272, %v270
    %v315 = vpack.c.b16 %v275, %v273
    %v316 = vpack.c.b16 %v276, %v274
    %v317 = vpack.c.b16 %v279, %v277
    %v318 = vpack.c.b16 %v280, %v278
    %v319 = vpack.c.b16 %v283, %v281
    %v320 = vpack.c.b16 %v284, %v282
    %v321 = vpack.c.b16 %v287, %v285
    %v322 = vpack.c.b16 %v288, %v286
    %v323 = vpack.c.b16 %v291, %v289
    %v324 = vpack.c.b16 %v292, %v290
    %v389 = vunpack.c.l.b16 %v101
    %v390 = vunpack.c.l.b16 %v102
    %v391 = vunpack.c.l.b16 %v103
    %v392 = vunpack.c.l.b16 %v104
    %v393 = vunpack.c.l.b16 %v105
    %v394 = vunpack.c.l.b16 %v106
    %v395 = vunpack.c.l.b16 %v107
    %v396 = vunpack.c.l.b16 %v108
    %v397 = vunpack.c.l.b16 %v109
    %v398 = vunpack.c.l.b16 %v110
    %v399 = vunpack.c.l.b16 %v111
    %v400 = vunpack.c.l.b16 %v112
    %v401 = vunpack.c.l.b16 %v113
    %v402 = vunpack.c.l.b16 %v114
    %v403 = vunpack.c.l.b16 %v115
    %v404 = vunpack.c.l.b16 %v116
    %v405 = vunpack.c.l.b16 %v117
    %v406 = vunpack.c.l.b16 %v118
    %v407 = vunpack.c.l.b16 %v119
    %v408 = vunpack.c.l.b16 %v120
    %v409 = vunpack.c.l.b16 %v121
    %v410 = vunpack.c.l.b16 %v122
    %v411 = vunpack.c.l.b16 %v123
    %v412 = vunpack.c.l.b16 %v124
    %v413 = vunpack.c.l.b16 %v125
    %v414 = vunpack.c.l.b16 %v126
    %v415 = vunpack.c.l.b16 %v127
    %v416 = vunpack.c.l.b16 %v128
    %v417 = vunpack.c.l.b16 %v129
    %v418 = vunpack.c.l.b16 %v130
    %v419 = vunpack.c.l.b16 %v131
    %v420 = vunpack.c.l.b16 %v132
    %v421 = vpack.c.b16 %v390, %v389
    %v422 = vpack.c.b16 %v392, %v391
    %v423 = vpack.c.b16 %v394, %v393
    %v424 = vpack.c.b16 %v396, %v395
    %v425 = vpack.c.b16 %v398, %v397
    %v426 = vpack.c.b16 %v400, %v399
    %v427 = vpack.c.b16 %v402, %v401
    %v428 = vpack.c.b16 %v404, %v403
    %v429 = vpack.c.b16 %v406, %v405
    %v430 = vpack.c.b16 %v408, %v407
    %v431 = vpack.c.b16 %v410, %v409
    %v432 = vpack.c.b16 %v412, %v411
    %v433 = vpack.c.b16 %v414, %v413
    %v434 = vpack.c.b16 %v416, %v415
    %v435 = vpack.c.b16 %v418, %v417
    %v436 = vpack.c.b16 %v420, %v419
    %453 = vmatprep.subr.bf16.mxu0 0
    %454 = vmatpush1.bf16.msra.mxu0 %v421
    %455 = vmatprep.subr.bf16.mxu0 0
    %456 = vmatpush1.bf16.msra.mxu0 %v422
    %457 = vmatprep.subr.bf16.mxu0 0
    %458 = vmatpush1.bf16.msra.mxu0 %v423
    %459 = vmatprep.subr.bf16.mxu0 0
    %460 = vmatpush1.bf16.msra.mxu0 %v424
    %461 = vmatprep.subr.bf16.mxu0 0
    %462 = vmatpush1.bf16.msra.mxu0 %v425
    %463 = vmatprep.subr.bf16.mxu0 0
    %464 = vmatpush1.bf16.msra.mxu0 %v426
    %465 = vmatprep.subr.bf16.mxu0 0
    %466 = vmatpush1.bf16.msra.mxu0 %v427
    %467 = vmatprep.subr.bf16.mxu0 0
    %468 = vmatpush1.bf16.msra.mxu0 %v428
    %469 = vmatprep.subr.bf16.mxu0 0
    %470 = vmatpush1.bf16.msra.mxu0 %v429
    %471 = vmatprep.subr.bf16.mxu0 0
    %472 = vmatpush1.bf16.msra.mxu0 %v430
    %473 = vmatprep.subr.bf16.mxu0 0
    %474 = vmatpush1.bf16.msra.mxu0 %v431
    %475 = vmatprep.subr.bf16.mxu0 0
    %476 = vmatpush1.bf16.msra.mxu0 %v432
    %477 = vmatprep.subr.bf16.mxu0 0
    %478 = vmatpush1.bf16.msra.mxu0 %v433
    %479 = vmatprep.subr.bf16.mxu0 0
    %480 = vmatpush1.bf16.msra.mxu0 %v434
    %481 = vmatprep.subr.bf16.mxu0 0
    %482 = vmatpush1.bf16.msra.mxu0 %v435
    %483 = vmatprep.subr.bf16.mxu0 0
    %484 = vmatpush1.bf16.msra.mxu0 %v436
    %485 = vmatprep.mubr.bf16.mxu0 %v294
    %486 = vmatmul.mubr.bf16.gmra.mrb[0].mxu0 %v293
    %v487 = vpop.f32.mrb[0].mxu0
    %v488 = vadd.f32 0.0, %v487
    %v489 = vpop.f32.mrb[0].mxu0
    %v490 = vpop.f32.mrb[0].mxu0
    %v491 = vadd.f32 0.0, %v490
    %v492 = vpop.f32.mrb[0].mxu0
    %493 = vmatprep.mubr.bf16.mxu0 %v296
    %494 = vmatmul.mubr.bf16.gmra.mrb[0].mxu0 %v295
    %v495 = vpop.f32.mrb[0].mxu0
    %v496 = vadd.f32 0.0, %v495
    %v497 = vpop.f32.mrb[0].mxu0
    %v498 = vpop.f32.mrb[0].mxu0
    %v499 = vadd.f32 0.0, %v498
    %v500 = vpop.f32.mrb[0].mxu0
    %501 = vmatprep.mubr.bf16.mxu0 %v298
    %502 = vmatmul.mubr.bf16.gmra.mrb[0].mxu0 %v297
    %v503 = vpop.f32.mrb[0].mxu0
    %v504 = vadd.f32 0.0, %v503
    %v505 = vpop.f32.mrb[0].mxu0
    %v506 = vpop.f32.mrb[0].mxu0
    %v507 = vadd.f32 0.0, %v506
    %v508 = vpop.f32.mrb[0].mxu0
    %509 = vmatprep.mubr.bf16.mxu0 %v300
    %510 = vmatmul.mubr.bf16.gmra.mrb[0].mxu0 %v299
    %v511 = vpop.f32.mrb[0].mxu0
    %v512 = vadd.f32 0.0, %v511
    %v513 = vpop.f32.mrb[0].mxu0
    %v514 = vpop.f32.mrb[0].mxu0
    %v515 = vadd.f32 0.0, %v514
    %v516 = vpop.f32.mrb[0].mxu0
    %517 = vmatprep.mubr.bf16.mxu0 %v302
    %518 = vmatmul.mubr.bf16.gmra.mrb[0].mxu0 %v301
    %v519 = vpop.f32.mrb[0].mxu0
    %v520 = vadd.f32 0.0, %v519
    %v521 = vpop.f32.mrb[0].mxu0
    %v522 = vpop.f32.mrb[0].mxu0
    %v523 = vadd.f32 0.0, %v522
    %v524 = vpop.f32.mrb[0].mxu0
    %525 = vmatprep.mubr.bf16.mxu0 %v304
    %526 = vmatmul.mubr.bf16.gmra.mrb[0].mxu0 %v303
    %v527 = vpop.f32.mrb[0].mxu0
    %v528 = vadd.f32 0.0, %v527
    %v529 = vpop.f32.mrb[0].mxu0
    %v530 = vpop.f32.mrb[0].mxu0
    %v531 = vadd.f32 0.0, %v530
    %v532 = vpop.f32.mrb[0].mxu0
    %533 = vmatprep.mubr.bf16.mxu0 %v306
    %534 = vmatmul.mubr.bf16.gmra.mrb[0].mxu0 %v305
    %v535 = vpop.f32.mrb[0].mxu0
    %v536 = vadd.f32 0.0, %v535
    %v537 = vpop.f32.mrb[0].mxu0
    %v538 = vpop.f32.mrb[0].mxu0
    %v539 = vadd.f32 0.0, %v538
    %v540 = vpop.f32.mrb[0].mxu0
    %541 = vmatprep.mubr.bf16.mxu0 %v308
    %542 = vmatmul.mubr.bf16.gmra.mrb[0].mxu0 %v307
    %v543 = vpop.f32.mrb[0].mxu0
    %v544 = vadd.f32 0.0, %v543
    %v545 = vpop.f32.mrb[0].mxu0
    %v546 = vpop.f32.mrb[0].mxu0
    %v547 = vadd.f32 0.0, %v546
    %v548 = vpop.f32.mrb[0].mxu0
    %549 = vmatprep.mubr.bf16.mxu0 %v310
    %550 = vmatmul.mubr.bf16.gmra.mrb[0].mxu0 %v309
    %v551 = vpop.f32.mrb[0].mxu0
    %v552 = vadd.f32 0.0, %v551
    %v553 = vpop.f32.mrb[0].mxu0
    %v554 = vpop.f32.mrb[0].mxu0
    %v555 = vadd.f32 0.0, %v554
    %v556 = vpop.f32.mrb[0].mxu0
    %557 = vmatprep.mubr.bf16.mxu0 %v312
    %558 = vmatmul.mubr.bf16.gmra.mrb[0].mxu0 %v311
    %v559 = vpop.f32.mrb[0].mxu0
    %v560 = vadd.f32 0.0, %v559
    %v561 = vpop.f32.mrb[0].mxu0
    %v562 = vpop.f32.mrb[0].mxu0
    %v563 = vadd.f32 0.0, %v562
    %v564 = vpop.f32.mrb[0].mxu0
    %565 = vmatprep.mubr.bf16.mxu0 %v314
    %566 = vmatmul.mubr.bf16.gmra.mrb[0].mxu0 %v313
    %v567 = vpop.f32.mrb[0].mxu0
    %v568 = vadd.f32 0.0, %v567
    %v569 = vpop.f32.mrb[0].mxu0
    %v570 = vpop.f32.mrb[0].mxu0
    %v571 = vadd.f32 0.0, %v570
    %v572 = vpop.f32.mrb[0].mxu0
    %573 = vmatprep.mubr.bf16.mxu0 %v316
    %574 = vmatmul.mubr.bf16.gmra.mrb[0].mxu0 %v315
    %v575 = vpop.f32.mrb[0].mxu0
    %v576 = vadd.f32 0.0, %v575
    %v577 = vpop.f32.mrb[0].mxu0
    %v578 = vpop.f32.mrb[0].mxu0
    %v579 = vadd.f32 0.0, %v578
    %v580 = vpop.f32.mrb[0].mxu0
    %581 = vmatprep.mubr.bf16.mxu0 %v318
    %582 = vmatmul.mubr.bf16.gmra.mrb[0].mxu0 %v317
    %v583 = vpop.f32.mrb[0].mxu0
    %v584 = vadd.f32 0.0, %v583
    %v585 = vpop.f32.mrb[0].mxu0
    %v586 = vpop.f32.mrb[0].mxu0
    %v587 = vadd.f32 0.0, %v586
    %v588 = vpop.f32.mrb[0].mxu0
    %589 = vmatprep.mubr.bf16.mxu0 %v320
    %590 = vmatmul.mubr.bf16.gmra.mrb[0].mxu0 %v319
    %v591 = vpop.f32.mrb[0].mxu0
    %v592 = vadd.f32 0.0, %v591
    %v593 = vpop.f32.mrb[0].mxu0
    %v594 = vpop.f32.mrb[0].mxu0
    %v595 = vadd.f32 0.0, %v594
    %v596 = vpop.f32.mrb[0].mxu0
    %597 = vmatprep.mubr.bf16.mxu0 %v322
    %598 = vmatmul.mubr.bf16.gmra.mrb[0].mxu0 %v321
    %v599 = vpop.f32.mrb[0].mxu0
    %v600 = vadd.f32 0.0, %v599
    %v601 = vpop.f32.mrb[0].mxu0
    %v602 = vpop.f32.mrb[0].mxu0
    %v603 = vadd.f32 0.0, %v602
    %v604 = vpop.f32.mrb[0].mxu0
    %605 = vmatprep.mubr.bf16.mxu0 %v324
    %606 = vmatmul.mubr.bf16.gmra.mrb[0].mxu0 %v323
    %v607 = vpop.f32.mrb[0].mxu0
    %v608 = vadd.f32 0.0, %v607
    %v609 = vpop.f32.mrb[0].mxu0
    %v610 = vpop.f32.mrb[0].mxu0
    %v611 = vadd.f32 0.0, %v610
    %v612 = vpop.f32.mrb[0].mxu0
    %613 = vdwg.mxu0
    %v614 = vadd.f32 %v133, %v488
    %v615 = vadd.f32 %v134, %v491
    %v616 = vadd.f32 %v135, %v496
    %v617 = vadd.f32 %v136, %v499
    %v618 = vadd.f32 %v137, %v504
    %v619 = vadd.f32 %v138, %v507
    %v620 = vadd.f32 %v139, %v512
    %v621 = vadd.f32 %v140, %v515
    %v622 = vadd.f32 %v141, %v520
    %v623 = vadd.f32 %v142, %v523
    %v624 = vadd.f32 %v143, %v528
    %v625 = vadd.f32 %v144, %v531
    %v626 = vadd.f32 %v145, %v536
    %v627 = vadd.f32 %v146, %v539
    %v628 = vadd.f32 %v147, %v544
    %v629 = vadd.f32 %v148, %v547
    %v630 = vadd.f32 %v149, %v552
    %v631 = vadd.f32 %v150, %v555
    %v632 = vadd.f32 %v151, %v560
    %v633 = vadd.f32 %v152, %v563
    %v634 = vadd.f32 %v153, %v568
    %v635 = vadd.f32 %v154, %v571
    %v636 = vadd.f32 %v155, %v576
    %v637 = vadd.f32 %v156, %v579
    %v638 = vadd.f32 %v157, %v584
    %v639 = vadd.f32 %v158, %v587
    %v640 = vadd.f32 %v159, %v592
    %v641 = vadd.f32 %v160, %v595
    %v642 = vadd.f32 %v161, %v600
    %v643 = vadd.f32 %v162, %v603
    %v644 = vadd.f32 %v163, %v608
    %v645 = vadd.f32 %v164, %v611
    %646 = vst [vmem:[#allocation2] sm:$0xff] %v614
    %647 = vst [vmem:[#allocation2 + $0x8] sm:$0xff] %v615
    %648 = vst [vmem:[#allocation2 + $0x10] sm:$0xff] %v616
    %649 = vst [vmem:[#allocation2 + $0x18] sm:$0xff] %v617
    %650 = vst [vmem:[#allocation2 + $0x20] sm:$0xff] %v618
    %651 = vst [vmem:[#allocation2 + $0x28] sm:$0xff] %v619
    %652 = vst [vmem:[#allocation2 + $0x30] sm:$0xff] %v620
    %653 = vst [vmem:[#allocation2 + $0x38] sm:$0xff] %v621
    %654 = vst [vmem:[#allocation2 + $0x40] sm:$0xff] %v622
    %655 = vst [vmem:[#allocation2 + $0x48] sm:$0xff] %v623
    %656 = vst [vmem:[#allocation2 + $0x50] sm:$0xff] %v624
    %657 = vst [vmem:[#allocation2 + $0x58] sm:$0xff] %v625
    %658 = vst [vmem:[#allocation2 + $0x60] sm:$0xff] %v626
    %659 = vst [vmem:[#allocation2 + $0x68] sm:$0xff] %v627
    %660 = vst [vmem:[#allocation2 + $0x70] sm:$0xff] %v628
    %661 = vst [vmem:[#allocation2 + $0x78] sm:$0xff] %v629
    %662 = vst [vmem:[#allocation2 + $0x80] sm:$0xff] %v630
    %663 = vst [vmem:[#allocation2 + $0x88] sm:$0xff] %v631
    %664 = vst [vmem:[#allocation2 + $0x90] sm:$0xff] %v632
    %665 = vst [vmem:[#allocation2 + $0x98] sm:$0xff] %v633
    %666 = vst [vmem:[#allocation2 + $0xa0] sm:$0xff] %v634
    %667 = vst [vmem:[#allocation2 + $0xa8] sm:$0xff] %v635
    %668 = vst [vmem:[#allocation2 + $0xb0] sm:$0xff] %v636
    %669 = vst [vmem:[#allocation2 + $0xb8] sm:$0xff] %v637
    %670 = vst [vmem:[#allocation2 + $0xc0] sm:$0xff] %v638
    %671 = vst [vmem:[#allocation2 + $0xc8] sm:$0xff] %v639
    %672 = vst [vmem:[#allocation2 + $0xd0] sm:$0xff] %v640
    %673 = vst [vmem:[#allocation2 + $0xd8] sm:$0xff] %v641
    %674 = vst [vmem:[#allocation2 + $0xe0] sm:$0xff] %v642
    %675 = vst [vmem:[#allocation2 + $0xe8] sm:$0xff] %v643
    %676 = vst [vmem:[#allocation2 + $0xf0] sm:$0xff] %v644
    %677 = vst [vmem:[#allocation2 + $0xf8] sm:$0xff] %v645
    // Predicated region
    $region34: #{tpu_custom_call.1} parent=1 // pred_check
      %p678 = pneg %p60
    $region35: #{tpu_custom_call.1} parent=1 // pred_check_branch
      %680 = sbr.rel (%p678) target = $region37
    $region36: #{tpu_custom_call.1} parent=1 // pred_region
      %v681 = vld [vmem:[#allocation2] sm:$0xff]
      %v682 = vld [vmem:[#allocation2 + $0x8] sm:$0xff]
      %v683 = vld [vmem:[#allocation2 + $0x10] sm:$0xff]
      %v684 = vld [vmem:[#allocation2 + $0x18] sm:$0xff]
      %v685 = vld [vmem:[#allocation2 + $0x20] sm:$0xff]
      %v686 = vld [vmem:[#allocation2 + $0x28] sm:$0xff]
      %v687 = vld [vmem:[#allocation2 + $0x30] sm:$0xff]
      %v688 = vld [vmem:[#allocation2 + $0x38] sm:$0xff]
      %v689 = vld [vmem:[#allocation2 + $0x40] sm:$0xff]
      %v690 = vld [vmem:[#allocation2 + $0x48] sm:$0xff]
      %v691 = vld [vmem:[#allocation2 + $0x50] sm:$0xff]
      %v692 = vld [vmem:[#allocation2 + $0x58] sm:$0xff]
      %v693 = vld [vmem:[#allocation2 + $0x60] sm:$0xff]
      %v694 = vld [vmem:[#allocation2 + $0x68] sm:$0xff]
      %v695 = vld [vmem:[#allocation2 + $0x70] sm:$0xff]
      %v696 = vld [vmem:[#allocation2 + $0x78] sm:$0xff]
      %v697 = vld [vmem:[#allocation2 + $0x80] sm:$0xff]
      %v698 = vld [vmem:[#allocation2 + $0x88] sm:$0xff]
      %v699 = vld [vmem:[#allocation2 + $0x90] sm:$0xff]
      %v700 = vld [vmem:[#allocation2 + $0x98] sm:$0xff]
      %v701 = vld [vmem:[#allocation2 + $0xa0] sm:$0xff]
      %v702 = vld [vmem:[#allocation2 + $0xa8] sm:$0xff]
      %v703 = vld [vmem:[#allocation2 + $0xb0] sm:$0xff]
      %v704 = vld [vmem:[#allocation2 + $0xb8] sm:$0xff]
      %v705 = vld [vmem:[#allocation2 + $0xc0] sm:$0xff]
      %v706 = vld [vmem:[#allocation2 + $0xc8] sm:$0xff]
      %v707 = vld [vmem:[#allocation2 + $0xd0] sm:$0xff]
      %v708 = vld [vmem:[#allocation2 + $0xd8] sm:$0xff]
      %v709 = vld [vmem:[#allocation2 + $0xe0] sm:$0xff]
      %v710 = vld [vmem:[#allocation2 + $0xe8] sm:$0xff]
      %v711 = vld [vmem:[#allocation2 + $0xf0] sm:$0xff]
      %v712 = vld [vmem:[#allocation2 + $0xf8] sm:$0xff]
      %v713 = vld [vmem:[#allocation8] sm:$0xff]
      %v714 = vld [vmem:[#allocation8 + $0x8] sm:$0xff]
      %v715 = vld [vmem:[#allocation8 + $0x10] sm:$0xff]
      %v716 = vld [vmem:[#allocation8 + $0x18] sm:$0xff]
      %v717 = vld [vmem:[#allocation8 + $0x20] sm:$0xff]
      %v718 = vld [vmem:[#allocation8 + $0x28] sm:$0xff]
      %v719 = vld [vmem:[#allocation8 + $0x30] sm:$0xff]
      %v720 = vld [vmem:[#allocation8 + $0x38] sm:$0xff]
      %v721 = vld [vmem:[#allocation8 + $0x40] sm:$0xff]
      %v722 = vld [vmem:[#allocation8 + $0x48] sm:$0xff]
      %v723 = vld [vmem:[#allocation8 + $0x50] sm:$0xff]
      %v724 = vld [vmem:[#allocation8 + $0x58] sm:$0xff]
      %v725 = vld [vmem:[#allocation8 + $0x60] sm:$0xff]
      %v726 = vld [vmem:[#allocation8 + $0x68] sm:$0xff]
      %v727 = vld [vmem:[#allocation8 + $0x70] sm:$0xff]
      %v728 = vld [vmem:[#allocation8 + $0x78] sm:$0xff]
      %v729 = vld [vmem:[#allocation8 + $0x80] sm:$0xff]
      %v730 = vld [vmem:[#allocation8 + $0x88] sm:$0xff]
      %v731 = vld [vmem:[#allocation8 + $0x90] sm:$0xff]
      %v732 = vld [vmem:[#allocation8 + $0x98] sm:$0xff]
      %v733 = vld [vmem:[#allocation8 + $0xa0] sm:$0xff]
      %v734 = vld [vmem:[#allocation8 + $0xa8] sm:$0xff]
      %v735 = vld [vmem:[#allocation8 + $0xb0] sm:$0xff]
      %v736 = vld [vmem:[#allocation8 + $0xb8] sm:$0xff]
      %v737 = vld [vmem:[#allocation8 + $0xc0] sm:$0xff]
      %v738 = vld [vmem:[#allocation8 + $0xc8] sm:$0xff]
      %v739 = vld [vmem:[#allocation8 + $0xd0] sm:$0xff]
      %v740 = vld [vmem:[#allocation8 + $0xd8] sm:$0xff]
      %v741 = vld [vmem:[#allocation8 + $0xe0] sm:$0xff]
      %v742 = vld [vmem:[#allocation8 + $0xe8] sm:$0xff]
      %v743 = vld [vmem:[#allocation8 + $0xf0] sm:$0xff]
      %v744 = vld [vmem:[#allocation8 + $0xf8] sm:$0xff]
      %v745 = vld [vmem:[#allocation8 + $0x100] sm:$0xff]
      %v746 = vld [vmem:[#allocation8 + $0x108] sm:$0xff]
      %v747 = vld [vmem:[#allocation8 + $0x110] sm:$0xff]
      %v748 = vld [vmem:[#allocation8 + $0x118] sm:$0xff]
      %v749 = vld [vmem:[#allocation8 + $0x120] sm:$0xff]
      %v750 = vld [vmem:[#allocation8 + $0x128] sm:$0xff]
      %v751 = vld [vmem:[#allocation8 + $0x130] sm:$0xff]
      %v752 = vld [vmem:[#allocation8 + $0x138] sm:$0xff]
      %v753 = vld [vmem:[#allocation8 + $0x140] sm:$0xff]
      %v754 = vld [vmem:[#allocation8 + $0x148] sm:$0xff]
      %v755 = vld [vmem:[#allocation8 + $0x150] sm:$0xff]
      %v756 = vld [vmem:[#allocation8 + $0x158] sm:$0xff]
      %v757 = vld [vmem:[#allocation8 + $0x160] sm:$0xff]
      %v758 = vld [vmem:[#allocation8 + $0x168] sm:$0xff]
      %v759 = vld [vmem:[#allocation8 + $0x170] sm:$0xff]
      %v760 = vld [vmem:[#allocation8 + $0x178] sm:$0xff]
      %v761 = vld [vmem:[%s3] sm:$0x7]
      %v763 = vlaneseq
      %v764 = vshrl.u32 %v763, 7
      %v765 = vsub.s32 0, %v764
      %v766 = vrot.slane %v761, %v765
      %v767 = vlaneseq
      %v768 = vshrl.u32 %v767, 7
      %v769 = vsub.s32 1, %v768
      %v770 = vrot.slane %v761, %v769
      %v771 = vlaneseq
      %v772 = vshrl.u32 %v771, 7
      %v773 = vsub.s32 2, %v772
      %v774 = vrot.slane %v761, %v773
      %778 = vmatprep.subr.mxu0 %v714
      %779 = vmatpush1.msra.mxu0 %v713
      %780 = vmatprep.subr.mxu0 %v717
      %781 = vmatpush1.msra.mxu0 %v716
      %782 = vmatprep.subr.mxu0 %v720
      %783 = vmatpush1.msra.mxu0 %v719
      %784 = vmatprep.subr.mxu0 %v723
      %785 = vmatpush1.msra.mxu0 %v722
      %786 = vmatprep.subr.mxu0 %v726
      %787 = vmatpush1.msra.mxu0 %v725
      %788 = vmatprep.subr.mxu0 %v729
      %789 = vmatpush1.msra.mxu0 %v728
      %790 = vmatprep.subr.mxu0 %v732
      %791 = vmatpush1.msra.mxu0 %v731
      %792 = vmatprep.subr.mxu0 %v735
      %793 = vmatpush1.msra.mxu0 %v734
      %794 = vmatprep.subr.mxu0 %v738
      %795 = vmatpush1.msra.mxu0 %v737
      %796 = vmatprep.subr.mxu0 %v741
      %797 = vmatpush1.msra.mxu0 %v740
      %798 = vmatprep.subr.mxu0 %v744
      %799 = vmatpush1.msra.mxu0 %v743
      %800 = vmatprep.subr.mxu0 %v747
      %801 = vmatpush1.msra.mxu0 %v746
      %802 = vmatprep.subr.mxu0 %v750
      %803 = vmatpush1.msra.mxu0 %v749
      %804 = vmatprep.subr.mxu0 %v753
      %805 = vmatpush1.msra.mxu0 %v752
      %806 = vmatprep.subr.mxu0 %v756
      %807 = vmatpush1.msra.mxu0 %v755
      %808 = vmatprep.subr.mxu0 %v759
      %809 = vmatpush1.msra.mxu0 %v758
      %810 = vmatprep.subr.mxu0 0.0
      %811 = vmatpush1.msra.mxu0 0.0
      %812 = vmatprep.subr.mxu0 0.0
      %813 = vmatpush1.msra.mxu0 0.0
      %814 = vmatprep.subr.mxu0 0.0
      %815 = vmatpush1.msra.mxu0 0.0
      %816 = vmatprep.subr.mxu0 0.0
      %817 = vmatpush1.msra.mxu0 0.0
      %818 = vmatprep.subr.mxu0 0.0
      %819 = vmatpush1.msra.mxu0 0.0
      %820 = vmatprep.subr.mxu0 0.0
      %821 = vmatpush1.msra.mxu0 0.0
      %822 = vmatprep.subr.mxu0 0.0
      %823 = vmatpush1.msra.mxu0 0.0
      %824 = vmatprep.subr.mxu0 0.0
      %825 = vmatpush1.msra.mxu0 0.0
      %826 = vmatprep.subr.mxu0 0.0
      %827 = vmatpush1.msra.mxu0 0.0
      %828 = vmatprep.subr.mxu0 0.0
      %829 = vmatpush1.msra.mxu0 0.0
      %830 = vmatprep.subr.mxu0 0.0
      %831 = vmatpush1.msra.mxu0 0.0
      %832 = vmatprep.subr.mxu0 0.0
      %833 = vmatpush1.msra.mxu0 0.0
      %834 = vmatprep.subr.mxu0 0.0
      %835 = vmatpush1.msra.mxu0 0.0
      %836 = vmatprep.subr.mxu0 0.0
      %837 = vmatpush1.msra.mxu0 0.0
      %838 = vmatprep.subr.mxu0 0.0
      %839 = vmatpush1.msra.mxu0 0.0
      %840 = vmatprep.subr.mxu0 0.0
      %841 = vmatpush1.msra.mxu0 0.0
      %842 = vmatprep.mubr.f32.mxu0 0.0
      %843 = vmatmul.mubr.f32.gmra.mrb[0].mxu0 %v681
      %v844 = vpop.f32.mrb[0].mxu0
      %v845 = vadd.f32 %v766, %v844
      %v846 = vpop.f32.mrb[0].mxu0
      %v847 = vadd.f32 %v770, %v846
      %848 = vmatprep.mubr.f32.mxu0 0.0
      %849 = vmatmul.mubr.f32.gmra.mrb[0].mxu0 %v682
      %v850 = vpop.f32.mrb[0].mxu0
      %v851 = vadd.f32 %v766, %v850
      %v852 = vpop.f32.mrb[0].mxu0
      %v853 = vadd.f32 %v770, %v852
      %854 = vmatprep.mubr.f32.mxu0 0.0
      %855 = vmatmul.mubr.f32.gmra.mrb[0].mxu0 %v683
      %v856 = vpop.f32.mrb[0].mxu0
      %v857 = vadd.f32 %v766, %v856
      %v858 = vpop.f32.mrb[0].mxu0
      %v859 = vadd.f32 %v770, %v858
      %860 = vmatprep.mubr.f32.mxu0 0.0
      %861 = vmatmul.mubr.f32.gmra.mrb[0].mxu0 %v684
      %v862 = vpop.f32.mrb[0].mxu0
      %v863 = vadd.f32 %v766, %v862
      %v864 = vpop.f32.mrb[0].mxu0
      %v865 = vadd.f32 %v770, %v864
      %866 = vmatprep.mubr.f32.mxu0 0.0
      %867 = vmatmul.mubr.f32.gmra.mrb[0].mxu0 %v685
      %v868 = vpop.f32.mrb[0].mxu0
      %v869 = vadd.f32 %v766, %v868
      %v870 = vpop.f32.mrb[0].mxu0
      %v871 = vadd.f32 %v770, %v870
      %872 = vmatprep.mubr.f32.mxu0 0.0
      %873 = vmatmul.mubr.f32.gmra.mrb[0].mxu0 %v686
      %v874 = vpop.f32.mrb[0].mxu0
      %v875 = vadd.f32 %v766, %v874
      %v876 = vpop.f32.mrb[0].mxu0
      %v877 = vadd.f32 %v770, %v876
      %878 = vmatprep.mubr.f32.mxu0 0.0
      %879 = vmatmul.mubr.f32.gmra.mrb[0].mxu0 %v687
      %v880 = vpop.f32.mrb[0].mxu0
      %v881 = vadd.f32 %v766, %v880
      %v882 = vpop.f32.mrb[0].mxu0
      %v883 = vadd.f32 %v770, %v882
      %884 = vmatprep.mubr.f32.mxu0 0.0
      %885 = vmatmul.mubr.f32.gmra.mrb[0].mxu0 %v688
      %v886 = vpop.f32.mrb[0].mxu0
      %v887 = vadd.f32 %v766, %v886
      %v888 = vpop.f32.mrb[0].mxu0
      %v889 = vadd.f32 %v770, %v888
      %890 = vmatprep.mubr.f32.mxu0 0.0
      %891 = vmatmul.mubr.f32.gmra.mrb[0].mxu0 %v689
      %v892 = vpop.f32.mrb[0].mxu0
      %v893 = vadd.f32 %v766, %v892
      %v894 = vpop.f32.mrb[0].mxu0
      %v895 = vadd.f32 %v770, %v894
      %896 = vmatprep.mubr.f32.mxu0 0.0
      %897 = vmatmul.mubr.f32.gmra.mrb[0].mxu0 %v690
      %v898 = vpop.f32.mrb[0].mxu0
      %v899 = vadd.f32 %v766, %v898
      %v900 = vpop.f32.mrb[0].mxu0
      %v901 = vadd.f32 %v770, %v900
      %902 = vmatprep.mubr.f32.mxu0 0.0
      %903 = vmatmul.mubr.f32.gmra.mrb[0].mxu0 %v691
      %v904 = vpop.f32.mrb[0].mxu0
      %v905 = vadd.f32 %v766, %v904
      %v906 = vpop.f32.mrb[0].mxu0
      %v907 = vadd.f32 %v770, %v906
      %908 = vmatprep.mubr.f32.mxu0 0.0
      %909 = vmatmul.mubr.f32.gmra.mrb[0].mxu0 %v692
      %v910 = vpop.f32.mrb[0].mxu0
      %v911 = vadd.f32 %v766, %v910
      %v912 = vpop.f32.mrb[0].mxu0
      %v913 = vadd.f32 %v770, %v912
      %914 = vmatprep.mubr.f32.mxu0 0.0
      %915 = vmatmul.mubr.f32.gmra.mrb[0].mxu0 %v693
      %v916 = vpop.f32.mrb[0].mxu0
      %v917 = vadd.f32 %v766, %v916
      %v918 = vpop.f32.mrb[0].mxu0
      %v919 = vadd.f32 %v770, %v918
      %920 = vmatprep.mubr.f32.mxu0 0.0
      %921 = vmatmul.mubr.f32.gmra.mrb[0].mxu0 %v694
      %v922 = vpop.f32.mrb[0].mxu0
      %v923 = vadd.f32 %v766, %v922
      %v924 = vpop.f32.mrb[0].mxu0
      %v925 = vadd.f32 %v770, %v924
      %926 = vmatprep.mubr.f32.mxu0 0.0
      %927 = vmatmul.mubr.f32.gmra.mrb[0].mxu0 %v695
      %v928 = vpop.f32.mrb[0].mxu0
      %v929 = vadd.f32 %v766, %v928
      %v930 = vpop.f32.mrb[0].mxu0
      %v931 = vadd.f32 %v770, %v930
      %932 = vmatprep.mubr.f32.mxu0 0.0
      %933 = vmatmul.mubr.f32.gmra.mrb[0].mxu0 %v696
      %v934 = vpop.f32.mrb[0].mxu0
      %v935 = vadd.f32 %v766, %v934
      %v936 = vpop.f32.mrb[0].mxu0
      %v937 = vadd.f32 %v770, %v936
      %938 = vmatprep.mubr.f32.mxu0 0.0
      %939 = vmatmul.mubr.f32.gmra.mrb[0].mxu0 %v697
      %v940 = vpop.f32.mrb[0].mxu0
      %v941 = vadd.f32 %v766, %v940
      %v942 = vpop.f32.mrb[0].mxu0
      %v943 = vadd.f32 %v770, %v942
      %944 = vmatprep.mubr.f32.mxu0 0.0
      %945 = vmatmul.mubr.f32.gmra.mrb[0].mxu0 %v698
      %v946 = vpop.f32.mrb[0].mxu0
      %v947 = vadd.f32 %v766, %v946
      %v948 = vpop.f32.mrb[0].mxu0
      %v949 = vadd.f32 %v770, %v948
      %950 = vmatprep.mubr.f32.mxu0 0.0
      %951 = vmatmul.mubr.f32.gmra.mrb[0].mxu0 %v699
      %v952 = vpop.f32.mrb[0].mxu0
      %v953 = vadd.f32 %v766, %v952
      %v954 = vpop.f32.mrb[0].mxu0
      %v955 = vadd.f32 %v770, %v954
      %956 = vmatprep.mubr.f32.mxu0 0.0
      %957 = vmatmul.mubr.f32.gmra.mrb[0].mxu0 %v700
      %v958 = vpop.f32.mrb[0].mxu0
      %v959 = vadd.f32 %v766, %v958
      %v960 = vpop.f32.mrb[0].mxu0
      %v961 = vadd.f32 %v770, %v960
      %962 = vmatprep.mubr.f32.mxu0 0.0
      %963 = vmatmul.mubr.f32.gmra.mrb[0].mxu0 %v701
      %v964 = vpop.f32.mrb[0].mxu0
      %v965 = vadd.f32 %v766, %v964
      %v966 = vpop.f32.mrb[0].mxu0
      %v967 = vadd.f32 %v770, %v966
      %968 = vmatprep.mubr.f32.mxu0 0.0
      %969 = vmatmul.mubr.f32.gmra.mrb[0].mxu0 %v702
      %v970 = vpop.f32.mrb[0].mxu0
      %v971 = vadd.f32 %v766, %v970
      %v972 = vpop.f32.mrb[0].mxu0
      %v973 = vadd.f32 %v770, %v972
      %974 = vmatprep.mubr.f32.mxu0 0.0
      %975 = vmatmul.mubr.f32.gmra.mrb[0].mxu0 %v703
      %v976 = vpop.f32.mrb[0].mxu0
      %v977 = vadd.f32 %v766, %v976
      %v978 = vpop.f32.mrb[0].mxu0
      %v979 = vadd.f32 %v770, %v978
      %980 = vmatprep.mubr.f32.mxu0 0.0
      %981 = vmatmul.mubr.f32.gmra.mrb[0].mxu0 %v704
      %v982 = vpop.f32.mrb[0].mxu0
      %v983 = vadd.f32 %v766, %v982
      %v984 = vpop.f32.mrb[0].mxu0
      %v985 = vadd.f32 %v770, %v984
      %986 = vmatprep.mubr.f32.mxu0 0.0
      %987 = vmatmul.mubr.f32.gmra.mrb[0].mxu0 %v705
      %v988 = vpop.f32.mrb[0].mxu0
      %v989 = vadd.f32 %v766, %v988
      %v990 = vpop.f32.mrb[0].mxu0
      %v991 = vadd.f32 %v770, %v990
      %992 = vmatprep.mubr.f32.mxu0 0.0
      %993 = vmatmul.mubr.f32.gmra.mrb[0].mxu0 %v706
      %v994 = vpop.f32.mrb[0].mxu0
      %v995 = vadd.f32 %v766, %v994
      %v996 = vpop.f32.mrb[0].mxu0
      %v997 = vadd.f32 %v770, %v996
      %998 = vmatprep.mubr.f32.mxu0 0.0
      %999 = vmatmul.mubr.f32.gmra.mrb[0].mxu0 %v707
      %v1000 = vpop.f32.mrb[0].mxu0
      %v1001 = vadd.f32 %v766, %v1000
      %v1002 = vpop.f32.mrb[0].mxu0
      %v1003 = vadd.f32 %v770, %v1002
      %1004 = vmatprep.mubr.f32.mxu0 0.0
      %1005 = vmatmul.mubr.f32.gmra.mrb[0].mxu0 %v708
      %v1006 = vpop.f32.mrb[0].mxu0
      %v1007 = vadd.f32 %v766, %v1006
      %v1008 = vpop.f32.mrb[0].mxu0
      %v1009 = vadd.f32 %v770, %v1008
      %1010 = vmatprep.mubr.f32.mxu0 0.0
      %1011 = vmatmul.mubr.f32.gmra.mrb[0].mxu0 %v709
      %v1012 = vpop.f32.mrb[0].mxu0
      %v1013 = vadd.f32 %v766, %v1012
      %v1014 = vpop.f32.mrb[0].mxu0
      %v1015 = vadd.f32 %v770, %v1014
      %1016 = vmatprep.mubr.f32.mxu0 0.0
      %1017 = vmatmul.mubr.f32.gmra.mrb[0].mxu0 %v710
      %v1018 = vpop.f32.mrb[0].mxu0
      %v1019 = vadd.f32 %v766, %v1018
      %v1020 = vpop.f32.mrb[0].mxu0
      %v1021 = vadd.f32 %v770, %v1020
      %1022 = vmatprep.mubr.f32.mxu0 0.0
      %1023 = vmatmul.mubr.f32.gmra.mrb[0].mxu0 %v711
      %v1024 = vpop.f32.mrb[0].mxu0
      %v1025 = vadd.f32 %v766, %v1024
      %v1026 = vpop.f32.mrb[0].mxu0
      %v1027 = vadd.f32 %v770, %v1026
      %1028 = vmatprep.mubr.f32.mxu0 0.0
      %1029 = vmatmul.mubr.f32.gmra.mrb[0].mxu0 %v712
      %v1030 = vpop.f32.mrb[0].mxu0
      %v1031 = vadd.f32 %v766, %v1030
      %v1032 = vpop.f32.mrb[0].mxu0
      %v1033 = vadd.f32 %v770, %v1032
      %1034 = vdwg.mxu0
      %1035 = vmatprep.subr.mxu0 0.0
      %1036 = vmatpush1.msra.mxu0 %v715
      %1037 = vmatprep.subr.mxu0 0.0
      %1038 = vmatpush1.msra.mxu0 %v718
      %1039 = vmatprep.subr.mxu0 0.0
      %1040 = vmatpush1.msra.mxu0 %v721
      %1041 = vmatprep.subr.mxu0 0.0
      %1042 = vmatpush1.msra.mxu0 %v724
      %1043 = vmatprep.subr.mxu0 0.0
      %1044 = vmatpush1.msra.mxu0 %v727
      %1045 = vmatprep.subr.mxu0 0.0
      %1046 = vmatpush1.msra.mxu0 %v730
      %1047 = vmatprep.subr.mxu0 0.0
      %1048 = vmatpush1.msra.mxu0 %v733
      %1049 = vmatprep.subr.mxu0 0.0
      %1050 = vmatpush1.msra.mxu0 %v736
      %1051 = vmatprep.subr.mxu0 0.0
      %1052 = vmatpush1.msra.mxu0 %v739
      %1053 = vmatprep.subr.mxu0 0.0
      %1054 = vmatpush1.msra.mxu0 %v742
      %1055 = vmatprep.subr.mxu0 0.0
      %1056 = vmatpush1.msra.mxu0 %v745
      %1057 = vmatprep.subr.mxu0 0.0
      %1058 = vmatpush1.msra.mxu0 %v748
      %1059 = vmatprep.subr.mxu0 0.0
      %1060 = vmatpush1.msra.mxu0 %v751
      %1061 = vmatprep.subr.mxu0 0.0
      %1062 = vmatpush1.msra.mxu0 %v754
      %1063 = vmatprep.subr.mxu0 0.0
      %1064 = vmatpush1.msra.mxu0 %v757
      %1065 = vmatprep.subr.mxu0 0.0
      %1066 = vmatpush1.msra.mxu0 %v760
      %1067 = vmatprep.subr.mxu0 0.0
      %1068 = vmatpush1.msra.mxu0 0.0
      %1069 = vmatprep.subr.mxu0 0.0
      %1070 = vmatpush1.msra.mxu0 0.0
      %1071 = vmatprep.subr.mxu0 0.0
      %1072 = vmatpush1.msra.mxu0 0.0
      %1073 = vmatprep.subr.mxu0 0.0
      %1074 = vmatpush1.msra.mxu0 0.0
      %1075 = vmatprep.subr.mxu0 0.0
      %1076 = vmatpush1.msra.mxu0 0.0
      %1077 = vmatprep.subr.mxu0 0.0
      %1078 = vmatpush1.msra.mxu0 0.0
      %1079 = vmatprep.subr.mxu0 0.0
      %1080 = vmatpush1.msra.mxu0 0.0
      %1081 = vmatprep.subr.mxu0 0.0
      %1082 = vmatpush1.msra.mxu0 0.0
      %1083 = vmatprep.subr.mxu0 0.0
      %1084 = vmatpush1.msra.mxu0 0.0
      %1085 = vmatprep.subr.mxu0 0.0
      %1086 = vmatpush1.msra.mxu0 0.0
      %1087 = vmatprep.subr.mxu0 0.0
      %1088 = vmatpush1.msra.mxu0 0.0
      %1089 = vmatprep.subr.mxu0 0.0
      %1090 = vmatpush1.msra.mxu0 0.0
      %1091 = vmatprep.subr.mxu0 0.0
      %1092 = vmatpush1.msra.mxu0 0.0
      %1093 = vmatprep.subr.mxu0 0.0
      %1094 = vmatpush1.msra.mxu0 0.0
      %1095 = vmatprep.subr.mxu0 0.0
      %1096 = vmatpush1.msra.mxu0 0.0
      %1097 = vmatprep.subr.mxu0 0.0
      %1098 = vmatpush1.msra.mxu0 0.0
      %1099 = vmatprep.mubr.f32.mxu0 0.0
      %1100 = vmatmul.mubr.f32.gmra.mrb[0].mxu0 %v681
      %v1101 = vpop.f32.mrb[0].mxu0
      %v1102 = vadd.f32 %v774, %v1101
      %v1103 = vpop.f32.mrb[0].mxu0
      %1104 = vmatprep.mubr.f32.mxu0 0.0
      %1105 = vmatmul.mubr.f32.gmra.mrb[0].mxu0 %v682
      %v1106 = vpop.f32.mrb[0].mxu0
      %v1107 = vadd.f32 %v774, %v1106
      %v1108 = vpop.f32.mrb[0].mxu0
      %1109 = vmatprep.mubr.f32.mxu0 0.0
      %1110 = vmatmul.mubr.f32.gmra.mrb[0].mxu0 %v683
      %v1111 = vpop.f32.mrb[0].mxu0
      %v1112 = vadd.f32 %v774, %v1111
      %v1113 = vpop.f32.mrb[0].mxu0
      %1114 = vmatprep.mubr.f32.mxu0 0.0
      %1115 = vmatmul.mubr.f32.gmra.mrb[0].mxu0 %v684
      %v1116 = vpop.f32.mrb[0].mxu0
      %v1117 = vadd.f32 %v774, %v1116
      %v1118 = vpop.f32.mrb[0].mxu0
      %1119 = vmatprep.mubr.f32.mxu0 0.0
      %1120 = vmatmul.mubr.f32.gmra.mrb[0].mxu0 %v685
      %v1121 = vpop.f32.mrb[0].mxu0
      %v1122 = vadd.f32 %v774, %v1121
      %v1123 = vpop.f32.mrb[0].mxu0
      %1124 = vmatprep.mubr.f32.mxu0 0.0
      %1125 = vmatmul.mubr.f32.gmra.mrb[0].mxu0 %v686
      %v1126 = vpop.f32.mrb[0].mxu0
      %v1127 = vadd.f32 %v774, %v1126
      %v1128 = vpop.f32.mrb[0].mxu0
      %1129 = vmatprep.mubr.f32.mxu0 0.0
      %1130 = vmatmul.mubr.f32.gmra.mrb[0].mxu0 %v687
      %v1131 = vpop.f32.mrb[0].mxu0
      %v1132 = vadd.f32 %v774, %v1131
      %v1133 = vpop.f32.mrb[0].mxu0
      %1134 = vmatprep.mubr.f32.mxu0 0.0
      %1135 = vmatmul.mubr.f32.gmra.mrb[0].mxu0 %v688
      %v1136 = vpop.f32.mrb[0].mxu0
      %v1137 = vadd.f32 %v774, %v1136
      %v1138 = vpop.f32.mrb[0].mxu0
      %1139 = vmatprep.mubr.f32.mxu0 0.0
      %1140 = vmatmul.mubr.f32.gmra.mrb[0].mxu0 %v689
      %v1141 = vpop.f32.mrb[0].mxu0
      %v1142 = vadd.f32 %v774, %v1141
      %v1143 = vpop.f32.mrb[0].mxu0
      %1144 = vmatprep.mubr.f32.mxu0 0.0
      %1145 = vmatmul.mubr.f32.gmra.mrb[0].mxu0 %v690
      %v1146 = vpop.f32.mrb[0].mxu0
      %v1147 = vadd.f32 %v774, %v1146
      %v1148 = vpop.f32.mrb[0].mxu0
      %1149 = vmatprep.mubr.f32.mxu0 0.0
      %1150 = vmatmul.mubr.f32.gmra.mrb[0].mxu0 %v691
      %v1151 = vpop.f32.mrb[0].mxu0
      %v1152 = vadd.f32 %v774, %v1151
      %v1153 = vpop.f32.mrb[0].mxu0
      %1154 = vmatprep.mubr.f32.mxu0 0.0
      %1155 = vmatmul.mubr.f32.gmra.mrb[0].mxu0 %v692
      %v1156 = vpop.f32.mrb[0].mxu0
      %v1157 = vadd.f32 %v774, %v1156
      %v1158 = vpop.f32.mrb[0].mxu0
      %1159 = vmatprep.mubr.f32.mxu0 0.0
      %1160 = vmatmul.mubr.f32.gmra.mrb[0].mxu0 %v693
      %v1161 = vpop.f32.mrb[0].mxu0
      %v1162 = vadd.f32 %v774, %v1161
      %v1163 = vpop.f32.mrb[0].mxu0
      %1164 = vmatprep.mubr.f32.mxu0 0.0
      %1165 = vmatmul.mubr.f32.gmra.mrb[0].mxu0 %v694
      %v1166 = vpop.f32.mrb[0].mxu0
      %v1167 = vadd.f32 %v774, %v1166
      %v1168 = vpop.f32.mrb[0].mxu0
      %1169 = vmatprep.mubr.f32.mxu0 0.0
      %1170 = vmatmul.mubr.f32.gmra.mrb[0].mxu0 %v695
      %v1171 = vpop.f32.mrb[0].mxu0
      %v1172 = vadd.f32 %v774, %v1171
      %v1173 = vpop.f32.mrb[0].mxu0
      %1174 = vmatprep.mubr.f32.mxu0 0.0
      %1175 = vmatmul.mubr.f32.gmra.mrb[0].mxu0 %v696
      %v1176 = vpop.f32.mrb[0].mxu0
      %v1177 = vadd.f32 %v774, %v1176
      %v1178 = vpop.f32.mrb[0].mxu0
      %1179 = vmatprep.mubr.f32.mxu0 0.0
      %1180 = vmatmul.mubr.f32.gmra.mrb[0].mxu0 %v697
      %v1181 = vpop.f32.mrb[0].mxu0
      %v1182 = vadd.f32 %v774, %v1181
      %v1183 = vpop.f32.mrb[0].mxu0
      %1184 = vmatprep.mubr.f32.mxu0 0.0
      %1185 = vmatmul.mubr.f32.gmra.mrb[0].mxu0 %v698
      %v1186 = vpop.f32.mrb[0].mxu0
      %v1187 = vadd.f32 %v774, %v1186
      %v1188 = vpop.f32.mrb[0].mxu0
      %1189 = vmatprep.mubr.f32.mxu0 0.0
      %1190 = vmatmul.mubr.f32.gmra.mrb[0].mxu0 %v699
      %v1191 = vpop.f32.mrb[0].mxu0
      %v1192 = vadd.f32 %v774, %v1191
      %v1193 = vpop.f32.mrb[0].mxu0
      %1194 = vmatprep.mubr.f32.mxu0 0.0
      %1195 = vmatmul.mubr.f32.gmra.mrb[0].mxu0 %v700
      %v1196 = vpop.f32.mrb[0].mxu0
      %v1197 = vadd.f32 %v774, %v1196
      %v1198 = vpop.f32.mrb[0].mxu0
      %1199 = vmatprep.mubr.f32.mxu0 0.0
      %1200 = vmatmul.mubr.f32.gmra.mrb[0].mxu0 %v701
      %v1201 = vpop.f32.mrb[0].mxu0
      %v1202 = vadd.f32 %v774, %v1201
      %v1203 = vpop.f32.mrb[0].mxu0
      %1204 = vmatprep.mubr.f32.mxu0 0.0
      %1205 = vmatmul.mubr.f32.gmra.mrb[0].mxu0 %v702
      %v1206 = vpop.f32.mrb[0].mxu0
      %v1207 = vadd.f32 %v774, %v1206
      %v1208 = vpop.f32.mrb[0].mxu0
      %1209 = vmatprep.mubr.f32.mxu0 0.0
      %1210 = vmatmul.mubr.f32.gmra.mrb[0].mxu0 %v703
      %v1211 = vpop.f32.mrb[0].mxu0
      %v1212 = vadd.f32 %v774, %v1211
      %v1213 = vpop.f32.mrb[0].mxu0
      %1214 = vmatprep.mubr.f32.mxu0 0.0
      %1215 = vmatmul.mubr.f32.gmra.mrb[0].mxu0 %v704
      %v1216 = vpop.f32.mrb[0].mxu0
      %v1217 = vadd.f32 %v774, %v1216
      %v1218 = vpop.f32.mrb[0].mxu0
      %1219 = vmatprep.mubr.f32.mxu0 0.0
      %1220 = vmatmul.mubr.f32.gmra.mrb[0].mxu0 %v705
      %v1221 = vpop.f32.mrb[0].mxu0
      %v1222 = vadd.f32 %v774, %v1221
      %v1223 = vpop.f32.mrb[0].mxu0
      %1224 = vmatprep.mubr.f32.mxu0 0.0
      %1225 = vmatmul.mubr.f32.gmra.mrb[0].mxu0 %v706
      %v1226 = vpop.f32.mrb[0].mxu0
      %v1227 = vadd.f32 %v774, %v1226
      %v1228 = vpop.f32.mrb[0].mxu0
      %1229 = vmatprep.mubr.f32.mxu0 0.0
      %1230 = vmatmul.mubr.f32.gmra.mrb[0].mxu0 %v707
      %v1231 = vpop.f32.mrb[0].mxu0
      %v1232 = vadd.f32 %v774, %v1231
      %v1233 = vpop.f32.mrb[0].mxu0
      %1234 = vmatprep.mubr.f32.mxu0 0.0
      %1235 = vmatmul.mubr.f32.gmra.mrb[0].mxu0 %v708
      %v1236 = vpop.f32.mrb[0].mxu0
      %v1237 = vadd.f32 %v774, %v1236
      %v1238 = vpop.f32.mrb[0].mxu0
      %1239 = vmatprep.mubr.f32.mxu0 0.0
      %1240 = vmatmul.mubr.f32.gmra.mrb[0].mxu0 %v709
      %v1241 = vpop.f32.mrb[0].mxu0
      %v1242 = vadd.f32 %v774, %v1241
      %v1243 = vpop.f32.mrb[0].mxu0
      %1244 = vmatprep.mubr.f32.mxu0 0.0
      %1245 = vmatmul.mubr.f32.gmra.mrb[0].mxu0 %v710
      %v1246 = vpop.f32.mrb[0].mxu0
      %v1247 = vadd.f32 %v774, %v1246
      %v1248 = vpop.f32.mrb[0].mxu0
      %1249 = vmatprep.mubr.f32.mxu0 0.0
      %1250 = vmatmul.mubr.f32.gmra.mrb[0].mxu0 %v711
      %v1251 = vpop.f32.mrb[0].mxu0
      %v1252 = vadd.f32 %v774, %v1251
      %v1253 = vpop.f32.mrb[0].mxu0
      %1254 = vmatprep.mubr.f32.mxu0 0.0
      %1255 = vmatmul.mubr.f32.gmra.mrb[0].mxu0 %v712
      %v1256 = vpop.f32.mrb[0].mxu0
      %v1257 = vadd.f32 %v774, %v1256
      %v1258 = vpop.f32.mrb[0].mxu0
      %1259 = vdwg.mxu0
      %v1260 = vmax.f32 %v845, 0.0
      %v1261 = vmax.f32 %v847, 0.0
      %v1262 = vmax.f32 %v1102, 0.0
      %v1263 = vmax.f32 %v851, 0.0
      %v1264 = vmax.f32 %v853, 0.0
      %v1265 = vmax.f32 %v1107, 0.0
      %v1266 = vmax.f32 %v857, 0.0
      %v1267 = vmax.f32 %v859, 0.0
      %v1268 = vmax.f32 %v1112, 0.0
      %v1269 = vmax.f32 %v863, 0.0
      %v1270 = vmax.f32 %v865, 0.0
      %v1271 = vmax.f32 %v1117, 0.0
      %v1272 = vmax.f32 %v869, 0.0
      %v1273 = vmax.f32 %v871, 0.0
      %v1274 = vmax.f32 %v1122, 0.0
      %v1275 = vmax.f32 %v875, 0.0
      %v1276 = vmax.f32 %v877, 0.0
      %v1277 = vmax.f32 %v1127, 0.0
      %v1278 = vmax.f32 %v881, 0.0
      %v1279 = vmax.f32 %v883, 0.0
      %v1280 = vmax.f32 %v1132, 0.0
      %v1281 = vmax.f32 %v887, 0.0
      %v1282 = vmax.f32 %v889, 0.0
      %v1283 = vmax.f32 %v1137, 0.0
      %v1284 = vmax.f32 %v893, 0.0
      %v1285 = vmax.f32 %v895, 0.0
      %v1286 = vmax.f32 %v1142, 0.0
      %v1287 = vmax.f32 %v899, 0.0
      %v1288 = vmax.f32 %v901, 0.0
      %v1289 = vmax.f32 %v1147, 0.0
      %v1290 = vmax.f32 %v905, 0.0
      %v1291 = vmax.f32 %v907, 0.0
      %v1292 = vmax.f32 %v1152, 0.0
      %v1293 = vmax.f32 %v911, 0.0
      %v1294 = vmax.f32 %v913, 0.0
      %v1295 = vmax.f32 %v1157, 0.0
      %v1296 = vmax.f32 %v917, 0.0
      %v1297 = vmax.f32 %v919, 0.0
      %v1298 = vmax.f32 %v1162, 0.0
      %v1299 = vmax.f32 %v923, 0.0
      %v1300 = vmax.f32 %v925, 0.0
      %v1301 = vmax.f32 %v1167, 0.0
      %v1302 = vmax.f32 %v929, 0.0
      %v1303 = vmax.f32 %v931, 0.0
      %v1304 = vmax.f32 %v1172, 0.0
      %v1305 = vmax.f32 %v935, 0.0
      %v1306 = vmax.f32 %v937, 0.0
      %v1307 = vmax.f32 %v1177, 0.0
      %v1308 = vmax.f32 %v941, 0.0
      %v1309 = vmax.f32 %v943, 0.0
      %v1310 = vmax.f32 %v1182, 0.0
      %v1311 = vmax.f32 %v947, 0.0
      %v1312 = vmax.f32 %v949, 0.0
      %v1313 = vmax.f32 %v1187, 0.0
      %v1314 = vmax.f32 %v953, 0.0
      %v1315 = vmax.f32 %v955, 0.0
      %v1316 = vmax.f32 %v1192, 0.0
      %v1317 = vmax.f32 %v959, 0.0
      %v1318 = vmax.f32 %v961, 0.0
      %v1319 = vmax.f32 %v1197, 0.0
      %v1320 = vmax.f32 %v965, 0.0
      %v1321 = vmax.f32 %v967, 0.0
      %v1322 = vmax.f32 %v1202, 0.0
      %v1323 = vmax.f32 %v971, 0.0
      %v1324 = vmax.f32 %v973, 0.0
      %v1325 = vmax.f32 %v1207, 0.0
      %v1326 = vmax.f32 %v977, 0.0
      %v1327 = vmax.f32 %v979, 0.0
      %v1328 = vmax.f32 %v1212, 0.0
      %v1329 = vmax.f32 %v983, 0.0
      %v1330 = vmax.f32 %v985, 0.0
      %v1331 = vmax.f32 %v1217, 0.0
      %v1332 = vmax.f32 %v989, 0.0
      %v1333 = vmax.f32 %v991, 0.0
      %v1334 = vmax.f32 %v1222, 0.0
      %v1335 = vmax.f32 %v995, 0.0
      %v1336 = vmax.f32 %v997, 0.0
      %v1337 = vmax.f32 %v1227, 0.0
      %v1338 = vmax.f32 %v1001, 0.0
      %v1339 = vmax.f32 %v1003, 0.0
      %v1340 = vmax.f32 %v1232, 0.0
      %v1341 = vmax.f32 %v1007, 0.0
      %v1342 = vmax.f32 %v1009, 0.0
      %v1343 = vmax.f32 %v1237, 0.0
      %v1344 = vmax.f32 %v1013, 0.0
      %v1345 = vmax.f32 %v1015, 0.0
      %v1346 = vmax.f32 %v1242, 0.0
      %v1347 = vmax.f32 %v1019, 0.0
      %v1348 = vmax.f32 %v1021, 0.0
      %v1349 = vmax.f32 %v1247, 0.0
      %v1350 = vmax.f32 %v1025, 0.0
      %v1351 = vmax.f32 %v1027, 0.0
      %v1352 = vmax.f32 %v1252, 0.0
      %v1353 = vmax.f32 %v1031, 0.0
      %v1354 = vmax.f32 %v1033, 0.0
      %v1355 = vmax.f32 %v1257, 0.0
      %v1356 = vpack.c.bf16 %v1263, %v1260
      %v1357 = vpack.c.bf16 %v1264, %v1261
      %v1358 = vpack.c.bf16 %v1265, %v1262
      %v1359 = vpack.c.bf16 %v1269, %v1266
      %v1360 = vpack.c.bf16 %v1270, %v1267
      %v1361 = vpack.c.bf16 %v1271, %v1268
      %v1362 = vpack.c.bf16 %v1275, %v1272
      %v1363 = vpack.c.bf16 %v1276, %v1273
      %v1364 = vpack.c.bf16 %v1277, %v1274
      %v1365 = vpack.c.bf16 %v1281, %v1278
      %v1366 = vpack.c.bf16 %v1282, %v1279
      %v1367 = vpack.c.bf16 %v1283, %v1280
      %v1368 = vpack.c.bf16 %v1287, %v1284
      %v1369 = vpack.c.bf16 %v1288, %v1285
      %v1370 = vpack.c.bf16 %v1289, %v1286
      %v1371 = vpack.c.bf16 %v1293, %v1290
      %v1372 = vpack.c.bf16 %v1294, %v1291
      %v1373 = vpack.c.bf16 %v1295, %v1292
      %v1374 = vpack.c.bf16 %v1299, %v1296
      %v1375 = vpack.c.bf16 %v1300, %v1297
      %v1376 = vpack.c.bf16 %v1301, %v1298
      %v1377 = vpack.c.bf16 %v1305, %v1302
      %v1378 = vpack.c.bf16 %v1306, %v1303
      %v1379 = vpack.c.bf16 %v1307, %v1304
      %v1380 = vpack.c.bf16 %v1311, %v1308
      %v1381 = vpack.c.bf16 %v1312, %v1309
      %v1382 = vpack.c.bf16 %v1313, %v1310
      %v1383 = vpack.c.bf16 %v1317, %v1314
      %v1384 = vpack.c.bf16 %v1318, %v1315
      %v1385 = vpack.c.bf16 %v1319, %v1316
      %v1386 = vpack.c.bf16 %v1323, %v1320
      %v1387 = vpack.c.bf16 %v1324, %v1321
      %v1388 = vpack.c.bf16 %v1325, %v1322
      %v1389 = vpack.c.bf16 %v1329, %v1326
      %v1390 = vpack.c.bf16 %v1330, %v1327
      %v1391 = vpack.c.bf16 %v1331, %v1328
      %v1392 = vpack.c.bf16 %v1335, %v1332
      %v1393 = vpack.c.bf16 %v1336, %v1333
      %v1394 = vpack.c.bf16 %v1337, %v1334
      %v1395 = vpack.c.bf16 %v1341, %v1338
      %v1396 = vpack.c.bf16 %v1342, %v1339
      %v1397 = vpack.c.bf16 %v1343, %v1340
      %v1398 = vpack.c.bf16 %v1347, %v1344
      %v1399 = vpack.c.bf16 %v1348, %v1345
      %v1400 = vpack.c.bf16 %v1349, %v1346
      %v1401 = vpack.c.bf16 %v1353, %v1350
      %v1402 = vpack.c.bf16 %v1354, %v1351
      %v1403 = vpack.c.bf16 %v1355, %v1352
      %v1452 = vunpack.c.l.b16 %v1356
      %v1453 = vunpack.c.l.b16 %v1357
      %v1454 = vunpack.c.l.b16 %v1358
      %v1455 = vunpack.c.h.b16 %v1356
      %v1456 = vunpack.c.h.b16 %v1357
      %v1457 = vunpack.c.h.b16 %v1358
      %v1458 = vunpack.c.l.b16 %v1359
      %v1459 = vunpack.c.l.b16 %v1360
      %v1460 = vunpack.c.l.b16 %v1361
      %v1461 = vunpack.c.h.b16 %v1359
      %v1462 = vunpack.c.h.b16 %v1360
      %v1463 = vunpack.c.h.b16 %v1361
      %v1464 = vunpack.c.l.b16 %v1362
      %v1465 = vunpack.c.l.b16 %v1363
      %v1466 = vunpack.c.l.b16 %v1364
      %v1467 = vunpack.c.h.b16 %v1362
      %v1468 = vunpack.c.h.b16 %v1363
      %v1469 = vunpack.c.h.b16 %v1364
      %v1470 = vunpack.c.l.b16 %v1365
      %v1471 = vunpack.c.l.b16 %v1366
      %v1472 = vunpack.c.l.b16 %v1367
      %v1473 = vunpack.c.h.b16 %v1365
      %v1474 = vunpack.c.h.b16 %v1366
      %v1475 = vunpack.c.h.b16 %v1367
      %v1476 = vunpack.c.l.b16 %v1368
      %v1477 = vunpack.c.l.b16 %v1369
      %v1478 = vunpack.c.l.b16 %v1370
      %v1479 = vunpack.c.h.b16 %v1368
      %v1480 = vunpack.c.h.b16 %v1369
      %v1481 = vunpack.c.h.b16 %v1370
      %v1482 = vunpack.c.l.b16 %v1371
      %v1483 = vunpack.c.l.b16 %v1372
      %v1484 = vunpack.c.l.b16 %v1373
      %v1485 = vunpack.c.h.b16 %v1371
      %v1486 = vunpack.c.h.b16 %v1372
      %v1487 = vunpack.c.h.b16 %v1373
      %v1488 = vunpack.c.l.b16 %v1374
      %v1489 = vunpack.c.l.b16 %v1375
      %v1490 = vunpack.c.l.b16 %v1376
      %v1491 = vunpack.c.h.b16 %v1374
      %v1492 = vunpack.c.h.b16 %v1375
      %v1493 = vunpack.c.h.b16 %v1376
      %v1494 = vunpack.c.l.b16 %v1377
      %v1495 = vunpack.c.l.b16 %v1378
      %v1496 = vunpack.c.l.b16 %v1379
      %v1497 = vunpack.c.h.b16 %v1377
      %v1498 = vunpack.c.h.b16 %v1378
      %v1499 = vunpack.c.h.b16 %v1379
      %v1500 = vunpack.c.l.b16 %v1380
      %v1501 = vunpack.c.l.b16 %v1381
      %v1502 = vunpack.c.l.b16 %v1382
      %v1503 = vunpack.c.h.b16 %v1380
      %v1504 = vunpack.c.h.b16 %v1381
      %v1505 = vunpack.c.h.b16 %v1382
      %v1506 = vunpack.c.l.b16 %v1383
      %v1507 = vunpack.c.l.b16 %v1384
      %v1508 = vunpack.c.l.b16 %v1385
      %v1509 = vunpack.c.h.b16 %v1383
      %v1510 = vunpack.c.h.b16 %v1384
      %v1511 = vunpack.c.h.b16 %v1385
      %v1512 = vunpack.c.l.b16 %v1386
      %v1513 = vunpack.c.l.b16 %v1387
      %v1514 = vunpack.c.l.b16 %v1388
      %v1515 = vunpack.c.h.b16 %v1386
      %v1516 = vunpack.c.h.b16 %v1387
      %v1517 = vunpack.c.h.b16 %v1388
      %v1518 = vunpack.c.l.b16 %v1389
      %v1519 = vunpack.c.l.b16 %v1390
      %v1520 = vunpack.c.l.b16 %v1391
      %v1521 = vunpack.c.h.b16 %v1389
      %v1522 = vunpack.c.h.b16 %v1390
      %v1523 = vunpack.c.h.b16 %v1391
      %v1524 = vunpack.c.l.b16 %v1392
      %v1525 = vunpack.c.l.b16 %v1393
      %v1526 = vunpack.c.l.b16 %v1394
      %v1527 = vunpack.c.h.b16 %v1392
      %v1528 = vunpack.c.h.b16 %v1393
      %v1529 = vunpack.c.h.b16 %v1394
      %v1530 = vunpack.c.l.b16 %v1395
      %v1531 = vunpack.c.l.b16 %v1396
      %v1532 = vunpack.c.l.b16 %v1397
      %v1533 = vunpack.c.h.b16 %v1395
      %v1534 = vunpack.c.h.b16 %v1396
      %v1535 = vunpack.c.h.b16 %v1397
      %v1536 = vunpack.c.l.b16 %v1398
      %v1537 = vunpack.c.l.b16 %v1399
      %v1538 = vunpack.c.l.b16 %v1400
      %v1539 = vunpack.c.h.b16 %v1398
      %v1540 = vunpack.c.h.b16 %v1399
      %v1541 = vunpack.c.h.b16 %v1400
      %v1542 = vunpack.c.l.b16 %v1401
      %v1543 = vunpack.c.l.b16 %v1402
      %v1544 = vunpack.c.l.b16 %v1403
      %v1545 = vunpack.c.h.b16 %v1401
      %v1546 = vunpack.c.h.b16 %v1402
      %v1547 = vunpack.c.h.b16 %v1403
      %v1548 = vpack.c.b16 %v1453, %v1452
      %v1549 = vpack.c.b16 %v1454, %v1454
      %v1550 = vpack.c.b16 %v1456, %v1455
      %v1551 = vpack.c.b16 %v1457, %v1457
      %v1552 = vpack.c.b16 %v1459, %v1458
      %v1553 = vpack.c.b16 %v1460, %v1460
      %v1554 = vpack.c.b16 %v1462, %v1461
      %v1555 = vpack.c.b16 %v1463, %v1463
      %v1556 = vpack.c.b16 %v1465, %v1464
      %v1557 = vpack.c.b16 %v1466, %v1466
      %v1558 = vpack.c.b16 %v1468, %v1467
      %v1559 = vpack.c.b16 %v1469, %v1469
      %v1560 = vpack.c.b16 %v1471, %v1470
      %v1561 = vpack.c.b16 %v1472, %v1472
      %v1562 = vpack.c.b16 %v1474, %v1473
      %v1563 = vpack.c.b16 %v1475, %v1475
      %v1564 = vpack.c.b16 %v1477, %v1476
      %v1565 = vpack.c.b16 %v1478, %v1478
      %v1566 = vpack.c.b16 %v1480, %v1479
      %v1567 = vpack.c.b16 %v1481, %v1481
      %v1568 = vpack.c.b16 %v1483, %v1482
      %v1569 = vpack.c.b16 %v1484, %v1484
      %v1570 = vpack.c.b16 %v1486, %v1485
      %v1571 = vpack.c.b16 %v1487, %v1487
      %v1572 = vpack.c.b16 %v1489, %v1488
      %v1573 = vpack.c.b16 %v1490, %v1490
      %v1574 = vpack.c.b16 %v1492, %v1491
      %v1575 = vpack.c.b16 %v1493, %v1493
      %v1576 = vpack.c.b16 %v1495, %v1494
      %v1577 = vpack.c.b16 %v1496, %v1496
      %v1578 = vpack.c.b16 %v1498, %v1497
      %v1579 = vpack.c.b16 %v1499, %v1499
      %v1580 = vpack.c.b16 %v1501, %v1500
      %v1581 = vpack.c.b16 %v1502, %v1502
      %v1582 = vpack.c.b16 %v1504, %v1503
      %v1583 = vpack.c.b16 %v1505, %v1505
      %v1584 = vpack.c.b16 %v1507, %v1506
      %v1585 = vpack.c.b16 %v1508, %v1508
      %v1586 = vpack.c.b16 %v1510, %v1509
      %v1587 = vpack.c.b16 %v1511, %v1511
      %v1588 = vpack.c.b16 %v1513, %v1512
      %v1589 = vpack.c.b16 %v1514, %v1514
      %v1590 = vpack.c.b16 %v1516, %v1515
      %v1591 = vpack.c.b16 %v1517, %v1517
      %v1592 = vpack.c.b16 %v1519, %v1518
      %v1593 = vpack.c.b16 %v1520, %v1520
      %v1594 = vpack.c.b16 %v1522, %v1521
      %v1595 = vpack.c.b16 %v1523, %v1523
      %v1596 = vpack.c.b16 %v1525, %v1524
      %v1597 = vpack.c.b16 %v1526, %v1526
      %v1598 = vpack.c.b16 %v1528, %v1527
      %v1599 = vpack.c.b16 %v1529, %v1529
      %v1600 = vpack.c.b16 %v1531, %v1530
      %v1601 = vpack.c.b16 %v1532, %v1532
      %v1602 = vpack.c.b16 %v1534, %v1533
      %v1603 = vpack.c.b16 %v1535, %v1535
      %v1604 = vpack.c.b16 %v1537, %v1536
      %v1605 = vpack.c.b16 %v1538, %v1538
      %v1606 = vpack.c.b16 %v1540, %v1539
      %v1607 = vpack.c.b16 %v1541, %v1541
      %v1608 = vpack.c.b16 %v1543, %v1542
      %v1609 = vpack.c.b16 %v1544, %v1544
      %v1610 = vpack.c.b16 %v1546, %v1545
      %v1611 = vpack.c.b16 %v1547, %v1547
      %1676 = vst [vmem:[#allocation9] sm:$0xff] %v1548
      %1677 = vst [vmem:[#allocation9 + $0x8] sm:$0xf] %v1549
      %1678 = vst [vmem:[#allocation9 + $0xc] sm:$0xff] %v1550
      %1679 = vst [vmem:[#allocation9 + $0x14] sm:$0xf] %v1551
      %1680 = vst [vmem:[#allocation9 + $0x18] sm:$0xff] %v1552
      %1681 = vst [vmem:[#allocation9 + $0x20] sm:$0xf] %v1553
      %1682 = vst [vmem:[#allocation9 + $0x24] sm:$0xff] %v1554
      %1683 = vst [vmem:[#allocation9 + $0x2c] sm:$0xf] %v1555
      %1684 = vst [vmem:[#allocation9 + $0x30] sm:$0xff] %v1556
      %1685 = vst [vmem:[#allocation9 + $0x38] sm:$0xf] %v1557
      %1686 = vst [vmem:[#allocation9 + $0x3c] sm:$0xff] %v1558
      %1687 = vst [vmem:[#allocation9 + $0x44] sm:$0xf] %v1559
      %1688 = vst [vmem:[#allocation9 + $0x48] sm:$0xff] %v1560
      %1689 = vst [vmem:[#allocation9 + $0x50] sm:$0xf] %v1561
      %1690 = vst [vmem:[#allocation9 + $0x54] sm:$0xff] %v1562
      %1691 = vst [vmem:[#allocation9 + $0x5c] sm:$0xf] %v1563
      %1692 = vst [vmem:[#allocation9 + $0x60] sm:$0xff] %v1564
      %1693 = vst [vmem:[#allocation9 + $0x68] sm:$0xf] %v1565
      %1694 = vst [vmem:[#allocation9 + $0x6c] sm:$0xff] %v1566
      %1695 = vst [vmem:[#allocation9 + $0x74] sm:$0xf] %v1567
      %1696 = vst [vmem:[#allocation9 + $0x78] sm:$0xff] %v1568
      %1697 = vst [vmem:[#allocation9 + $0x80] sm:$0xf] %v1569
      %1698 = vst [vmem:[#allocation9 + $0x84] sm:$0xff] %v1570
      %1699 = vst [vmem:[#allocation9 + $0x8c] sm:$0xf] %v1571
      %1700 = vst [vmem:[#allocation9 + $0x90] sm:$0xff] %v1572
      %1701 = vst [vmem:[#allocation9 + $0x98] sm:$0xf] %v1573
      %1702 = vst [vmem:[#allocation9 + $0x9c] sm:$0xff] %v1574
      %1703 = vst [vmem:[#allocation9 + $0xa4] sm:$0xf] %v1575
      %1704 = vst [vmem:[#allocation9 + $0xa8] sm:$0xff] %v1576
      %1705 = vst [vmem:[#allocation9 + $0xb0] sm:$0xf] %v1577
      %1706 = vst [vmem:[#allocation9 + $0xb4] sm:$0xff] %v1578
      %1707 = vst [vmem:[#allocation9 + $0xbc] sm:$0xf] %v1579
      %1708 = vst [vmem:[#allocation9 + $0xc0] sm:$0xff] %v1580
      %1709 = vst [vmem:[#allocation9 + $0xc8] sm:$0xf] %v1581
      %1710 = vst [vmem:[#allocation9 + $0xcc] sm:$0xff] %v1582
      %1711 = vst [vmem:[#allocation9 + $0xd4] sm:$0xf] %v1583
      %1712 = vst [vmem:[#allocation9 + $0xd8] sm:$0xff] %v1584
      %1713 = vst [vmem:[#allocation9 + $0xe0] sm:$0xf] %v1585
      %1714 = vst [vmem:[#allocation9 + $0xe4] sm:$0xff] %v1586
      %1715 = vst [vmem:[#allocation9 + $0xec] sm:$0xf] %v1587
      %1716 = vst [vmem:[#allocation9 + $0xf0] sm:$0xff] %v1588
      %1717 = vst [vmem:[#allocation9 + $0xf8] sm:$0xf] %v1589
      %1718 = vst [vmem:[#allocation9 + $0xfc] sm:$0xff] %v1590
      %1719 = vst [vmem:[#allocation9 + $0x104] sm:$0xf] %v1591
      %1720 = vst [vmem:[#allocation9 + $0x108] sm:$0xff] %v1592
      %1721 = vst [vmem:[#allocation9 + $0x110] sm:$0xf] %v1593
      %1722 = vst [vmem:[#allocation9 + $0x114] sm:$0xff] %v1594
      %1723 = vst [vmem:[#allocation9 + $0x11c] sm:$0xf] %v1595
      %1724 = vst [vmem:[#allocation9 + $0x120] sm:$0xff] %v1596
      %1725 = vst [vmem:[#allocation9 + $0x128] sm:$0xf] %v1597
      %1726 = vst [vmem:[#allocation9 + $0x12c] sm:$0xff] %v1598
      %1727 = vst [vmem:[#allocation9 + $0x134] sm:$0xf] %v1599
      %1728 = vst [vmem:[#allocation9 + $0x138] sm:$0xff] %v1600
      %1729 = vst [vmem:[#allocation9 + $0x140] sm:$0xf] %v1601
      %1730 = vst [vmem:[#allocation9 + $0x144] sm:$0xff] %v1602
      %1731 = vst [vmem:[#allocation9 + $0x14c] sm:$0xf] %v1603
      %1732 = vst [vmem:[#allocation9 + $0x150] sm:$0xff] %v1604
      %1733 = vst [vmem:[#allocation9 + $0x158] sm:$0xf] %v1605
      %1734 = vst [vmem:[#allocation9 + $0x15c] sm:$0xff] %v1606
      %1735 = vst [vmem:[#allocation9 + $0x164] sm:$0xf] %v1607
      %1736 = vst [vmem:[#allocation9 + $0x168] sm:$0xff] %v1608
      %1737 = vst [vmem:[#allocation9 + $0x170] sm:$0xf] %v1609
      %1738 = vst [vmem:[#allocation9 + $0x174] sm:$0xff] %v1610
      %1739 = vst [vmem:[#allocation9 + $0x17c] sm:$0xf] %v1611
    $region37: #{tpu_custom_call.1} parent=1 // pred_fallthru
      _
    // Predicated region
    $region38: #{tpu_custom_call.1} parent=1 // pred_check
      _
    $region39: #{tpu_custom_call.1} parent=1 // pred_check_branch
      %1741 = sbr.rel (0) target = $region41
    $region40: #{tpu_custom_call.1} parent=1 // pred_region
      %s1743 = ssub.s32 6144, 6144
      %1744 = vsyncadd [#allocation5], %s1743
      %s1745 = sshll.u32 [#allocation9], 4
      %s1746 = int_to_ptr.vmem [resolvable:$true] %s1745
      %1751 = dma.vmem_to_hbm [thread:$0]  %s1746, 6144, %s4, [#allocation5], 192, 192, 12
    $region41: #{tpu_custom_call.1} parent=1 // pred_fallthru
      _
    // Predicated region
    $region42: #{tpu_custom_call.1} parent=1 // pred_check
      _
    $region43: #{tpu_custom_call.1} parent=1 // pred_check_branch
      %1753 = sbr.rel (0) target = $region45
    $region44: #{tpu_custom_call.1} parent=1 // pred_region
      %1754 = dma.done [#allocation5], 6144
    $region45: #{tpu_custom_call.1} parent=1 // pred_fallthru
      _
    %1755 = vsyncpa [#allocation4], 1
    %1756 = vsyncpa [#allocation7], 1
    %1757 = vsyncpa [#allocation5], 1

</llo_original>
